<compile_context>
chip_gen: v7x
topology: tpu7x:2x2x1
jax: 0.10.0
libtpu: 0.0.40
codegen_flags: <defaults>
</compile_context>

<pallas_src>
import jax
import jax.numpy as jnp
from jax import lax
from jax.experimental import pallas as pl
from jax.experimental.pallas import tpu as pltpu
from functools import partial
from math import sqrt


def _mha_kernel(x_ref, wqkv_ref, bqkv_ref, wo_ref, bo_ref, o_ref, *,
                B, S, H, L):
    """Fused multi-head attention forward, single grid step.

    x_ref    : (B*S, E)      flattened input
    wqkv_ref : (E, 3*H*L)    [scaled Wq heads | Wk heads | Wv heads]
    bqkv_ref : (1, 3*H*L)    matching biases (Q part pre-scaled by 1/sqrt(L))
    wo_ref   : (H*L, E)      output projection (x @ W layout)
    bo_ref   : (1, E)
    o_ref    : (B*S, E)
    """
    HL = H * L
    E = o_ref.shape[-1]

    x = x_ref[...]                                               # (B*S, E)

    # One wide MXU matmul for all heads' Q, K, V projections (f32 accumulate).
    qkv = jnp.dot(x, wqkv_ref[...],
                  preferred_element_type=jnp.float32) + bqkv_ref[...]

    # 128-lane-aligned splits (HL = 128 at the demo shapes).
    q_all = qkv[:, 0 * HL:1 * HL].reshape(B, S, HL)              # already /sqrt(L)
    k_all = qkv[:, 1 * HL:2 * HL].reshape(B, S, HL)
    v_all = qkv[:, 2 * HL:3 * HL].reshape(B, S, HL)

    # Accumulate heads straight into the output projection:
    #   out = sum_h  A_h @ Wo[h*L:(h+1)*L, :]  + bo
    acc = jnp.zeros((B * S, E), jnp.float32)
    for h in range(H):                                           # H static -> unrolled
        lo = h * L
        q = q_all[:, :, lo:lo + L]                               # (B, S, L)
        k = k_all[:, :, lo:lo + L]
        v = v_all[:, :, lo:lo + L]

        # scores_b = q_b @ k_b^T  (contract last dims, batch over B; no .T)
        s = lax.dot_general(q, k, (((2,), (2,)), ((0,), (0,))),
                            preferred_element_type=jnp.float32)  # (B, S, S)

        m = jnp.max(s, axis=-1, keepdims=True)
        e = jnp.exp(s - m)
        denom = jnp.sum(e, axis=-1, keepdims=True)
        p = e * pl.reciprocal(denom, approx=True)                # EUP vrcp

        head = lax.dot_general(p, v, (((2,), (1,)), ((0,), (0,))),
                               preferred_element_type=jnp.float32)  # (B, S, L)

        acc = acc + jnp.dot(head.reshape(B * S, L), wo_ref[lo:lo + L, :],
                            preferred_element_type=jnp.float32)

    o_ref[...] = (acc + bo_ref[...]).astype(o_ref.dtype)


def multi_head_attention_forward(x, wq, bq, wk, bk, wv, bv, wo, bo):
    """
    x          : (B, S, E)
    wq, wk, wv : (H, E, L)   per-head projection weights (x @ W layout)
    bq, bk, bv : (H, L)
    wo         : (H*L, E)    output projection (x @ W layout)
    bo         : (E,)
    returns (B, S, E)
    """
    B, S, E = x.shape
    H, _, L = wq.shape
    inv_scale = 1.0 / sqrt(L)

    # ---- weight prep (one-time cost; in a real model hoist out of the call) --
    # Fold 1/sqrt(L) into the Q weights/bias and fuse all heads + [Q|K|V] into
    # a single (E, 3*H*L) weight: one wide, lane-dense in-kernel matmul.
    wq_f = (wq * inv_scale).transpose(1, 0, 2).reshape(E, H * L)
    wk_f = wk.transpose(1, 0, 2).reshape(E, H * L)
    wv_f = wv.transpose(1, 0, 2).reshape(E, H * L)
    w_qkv = jnp.concatenate([wq_f, wk_f, wv_f], axis=1)              # (E, 3*H*L)
    b_qkv = jnp.concatenate([(bq * inv_scale).reshape(1, H * L),
                             bk.reshape(1, H * L),
                             bv.reshape(1, H * L)], axis=1)          # (1, 3*H*L)

    x2 = x.reshape(B * S, E)   # flatten batch*seq -> taller MXU M, denser sublanes
    bo2 = bo.reshape(1, E)

    kernel = partial(_mha_kernel, B=B, S=S, H=H, L=L)
    vmem = lambda: pl.BlockSpec(memory_space=pltpu.MemorySpace.VMEM)

    out2 = pl.pallas_call(
        kernel,
        out_shape=jax.ShapeDtypeStruct((B * S, E), x.dtype),
        in_specs=[vmem() for _ in range(5)],
        out_specs=vmem(),
        # no grid: single invocation, whole problem resident in VMEM
    )(x2, w_qkv, b_qkv, wo, bo2)

    return out2.reshape(B, S, E)


def reference_mha(x, wq, bq, wk, bk, wv, bv, wo, bo):
    """Pure-JAX reference mirroring the PyTorch MultiHeadedAttention forward."""
    H, _, L = wq.shape
    heads = []
    for h in range(H):
        q = x @ wq[h] + bq[h]
        k = x @ wk[h] + bk[h]
        v = x @ wv[h] + bv[h]
        s = jnp.einsum("bqd,bkd->bqk", q, k) / sqrt(L)
        p = jax.nn.softmax(s, axis=-1)
        heads.append(jnp.einsum("bqk,bkd->bqd", p, v))
    z = jnp.concatenate(heads, axis=-1)
    return z @ wo + bo


if __name__ == "__main__":
    # Small shapes consistent with the module: batch=2, seq=8, embed=32,
    # latent=32, num_heads=4.
    B, S, E, L, H = 2, 8, 32, 32, 4
    key = jax.random.PRNGKey(0)
    keys = jax.random.split(key, 9)

    x = jax.random.normal(keys[0], (B, S, E), dtype=jnp.float32)

    # Deterministic parameter init (PyTorch nn.Linear-style uniform bound).
    bound = 1.0 / sqrt(E)
    wq = jax.random.uniform(keys[1], (H, E, L), jnp.float32, -bound, bound)
    bq = jax.random.uniform(keys[2], (H, L), jnp.float32, -bound, bound)
    wk = jax.random.uniform(keys[3], (H, E, L), jnp.float32, -bound, bound)
    bk = jax.random.uniform(keys[4], (H, L), jnp.float32, -bound, bound)
    wv = jax.random.uniform(keys[5], (H, E, L), jnp.float32, -bound, bound)
    bv = jax.random.uniform(keys[6], (H, L), jnp.float32, -bound, bound)

    bound_o = 1.0 / sqrt(H * L)
    wo = jax.random.uniform(keys[7], (H * L, E), jnp.float32, -bound_o, bound_o)
    bo = jax.random.uniform(keys[8], (E,), jnp.float32, -bound_o, bound_o)

    out = multi_head_attention_forward(x, wq, bq, wk, bk, wv, bv, wo, bo)
    out = jax.block_until_ready(out)

    ref = reference_mha(x, wq, bq, wk, bk, wv, bv, wo, bo)
    assert out.shape == (B, S, E), out.shape
    # approx=True softmax reciprocal slightly loosens the tolerance vs exact.
    max_err = float(jnp.max(jnp.abs(out - ref)))
    assert jnp.allclose(out, ref, atol=1e-2, rtol=1e-2), max_err

    print("KERNEL_OK")
</pallas_src>

<mosaic_0001>
module attributes {stable_mosaic.version = 11 : i64} {
  func.func @_mha_kernel(%arg0: memref<16x32xf32, #tpu.memory_space<vmem>>, %arg1: memref<32x384xf32, #tpu.memory_space<vmem>>, %arg2: memref<1x384xf32, #tpu.memory_space<vmem>>, %arg3: memref<128x32xf32, #tpu.memory_space<vmem>>, %arg4: memref<1x32xf32, #tpu.memory_space<vmem>>, %arg5: memref<16x32xf32, #tpu.memory_space<vmem>>) attributes {dimension_semantics = [], scalar_prefetch = 0 : i64, scratch_operands = 0 : i64, tpu.core_type = #tpu.core_type<tc>} {
    %c0 = arith.constant 0 : index
    %c0_0 = arith.constant 0 : index
    %0 = vector.load %arg0[%c0, %c0_0] : memref<16x32xf32, #tpu.memory_space<vmem>>, vector<16x32xf32>
    %c0_1 = arith.constant 0 : index
    %c0_2 = arith.constant 0 : index
    %1 = vector.load %arg1[%c0_1, %c0_2] : memref<32x384xf32, #tpu.memory_space<vmem>>, vector<32x384xf32>
    %cst = arith.constant dense<0.000000e+00> : vector<16x384xf32>
    %2 = tpu.matmul %0, %1, %cst {dimension_numbers = #tpu.dot_dimension_numbers<[1], [0], [0], [1], [0, 0, 1, 1], [], []>} : vector<16x32xf32>, vector<32x384xf32>, vector<16x384xf32> -> vector<16x384xf32>
    %c0_3 = arith.constant 0 : index
    %c0_4 = arith.constant 0 : index
    %3 = vector.load %arg2[%c0_3, %c0_4] : memref<1x384xf32, #tpu.memory_space<vmem>>, vector<1x384xf32>
    %4 = vector.broadcast %3 : vector<1x384xf32> to vector<16x384xf32>
    %5 = arith.addf %2, %4 : vector<16x384xf32>
    %6 = vector.extract_strided_slice %5 {offsets = [0, 0], sizes = [16, 128], strides = [1, 1]} : vector<16x384xf32> to vector<16x128xf32>
    %7 = vector.shape_cast %6 : vector<16x128xf32> to vector<2x8x128xf32>
    %8 = vector.extract_strided_slice %5 {offsets = [0, 128], sizes = [16, 128], strides = [1, 1]} : vector<16x384xf32> to vector<16x128xf32>
    %9 = vector.shape_cast %8 : vector<16x128xf32> to vector<2x8x128xf32>
    %10 = vector.extract_strided_slice %5 {offsets = [0, 256], sizes = [16, 128], strides = [1, 1]} : vector<16x384xf32> to vector<16x128xf32>
    %11 = vector.shape_cast %10 : vector<16x128xf32> to vector<2x8x128xf32>
    %cst_5 = arith.constant 0.000000e+00 : f32
    %12 = vector.broadcast %cst_5 : f32 to vector<16x32xf32>
    %13 = vector.extract_strided_slice %7 {offsets = [0, 0, 0], sizes = [2, 8, 32], strides = [1, 1, 1]} : vector<2x8x128xf32> to vector<2x8x32xf32>
    %14 = vector.extract_strided_slice %9 {offsets = [0, 0, 0], sizes = [2, 8, 32], strides = [1, 1, 1]} : vector<2x8x128xf32> to vector<2x8x32xf32>
    %15 = vector.extract_strided_slice %11 {offsets = [0, 0, 0], sizes = [2, 8, 32], strides = [1, 1, 1]} : vector<2x8x128xf32> to vector<2x8x32xf32>
    %cst_6 = arith.constant dense<0.000000e+00> : vector<2x8x8xf32>
    %16 = tpu.matmul %13, %14, %cst_6 {dimension_numbers = #tpu.dot_dimension_numbers<[2], [2], [1], [1], [0, 0, 0, 1, 1, 1], [0], [0]>} : vector<2x8x32xf32>, vector<2x8x32xf32>, vector<2x8x8xf32> -> vector<2x8x8xf32>
    %cst_7 = arith.constant dense<0xFF800000> : vector<2x8xf32>
    %17 = vector.multi_reduction <maximumf>, %16, %cst_7 [2] : vector<2x8x8xf32> to vector<2x8xf32>
    %18 = vector.shape_cast %17 : vector<2x8xf32> to vector<2x8x1xf32>
    %19 = vector.broadcast %18 : vector<2x8x1xf32> to vector<2x8x8xf32>
    %20 = arith.subf %16, %19 : vector<2x8x8xf32>
    %21 = math.exp %20 : vector<2x8x8xf32>
    %cst_8 = arith.constant dense<0.000000e+00> : vector<2x8xf32>
    %22 = vector.multi_reduction <add>, %21, %cst_8 [2] : vector<2x8x8xf32> to vector<2x8xf32>
    %23 = vector.shape_cast %22 : vector<2x8xf32> to vector<2x8x1xf32>
    %24 = tpu.reciprocal %23 {approx = true} : vector<2x8x1xf32> -> vector<2x8x1xf32>
    %25 = vector.broadcast %24 : vector<2x8x1xf32> to vector<2x8x8xf32>
    %26 = arith.mulf %21, %25 : vector<2x8x8xf32>
    %cst_9 = arith.constant dense<0.000000e+00> : vector<2x8x32xf32>
    %27 = tpu.matmul %26, %15, %cst_9 {dimension_numbers = #tpu.dot_dimension_numbers<[2], [1], [1], [2], [0, 0, 0, 1, 1, 2], [0], [0]>} : vector<2x8x8xf32>, vector<2x8x32xf32>, vector<2x8x32xf32> -> vector<2x8x32xf32>
    %28 = vector.shape_cast %27 : vector<2x8x32xf32> to vector<16x32xf32>
    %c0_10 = arith.constant 0 : index
    %c0_11 = arith.constant 0 : index
    %29 = vector.load %arg3[%c0_10, %c0_11] : memref<128x32xf32, #tpu.memory_space<vmem>>, vector<32x32xf32>
    %cst_12 = arith.constant dense<0.000000e+00> : vector<16x32xf32>
    %30 = tpu.matmul %28, %29, %cst_12 {dimension_numbers = #tpu.dot_dimension_numbers<[1], [0], [0], [1], [0, 0, 1, 1], [], []>} : vector<16x32xf32>, vector<32x32xf32>, vector<16x32xf32> -> vector<16x32xf32>
    %31 = arith.addf %12, %30 : vector<16x32xf32>
    %32 = vector.extract_strided_slice %7 {offsets = [0, 0, 32], sizes = [2, 8, 32], strides = [1, 1, 1]} : vector<2x8x128xf32> to vector<2x8x32xf32>
    %33 = vector.extract_strided_slice %9 {offsets = [0, 0, 32], sizes = [2, 8, 32], strides = [1, 1, 1]} : vector<2x8x128xf32> to vector<2x8x32xf32>
    %34 = vector.extract_strided_slice %11 {offsets = [0, 0, 32], sizes = [2, 8, 32], strides = [1, 1, 1]} : vector<2x8x128xf32> to vector<2x8x32xf32>
    %cst_13 = arith.constant dense<0.000000e+00> : vector<2x8x8xf32>
    %35 = tpu.matmul %32, %33, %cst_13 {dimension_numbers = #tpu.dot_dimension_numbers<[2], [2], [1], [1], [0, 0, 0, 1, 1, 1], [0], [0]>} : vector<2x8x32xf32>, vector<2x8x32xf32>, vector<2x8x8xf32> -> vector<2x8x8xf32>
    %cst_14 = arith.constant dense<0xFF800000> : vector<2x8xf32>
    %36 = vector.multi_reduction <maximumf>, %35, %cst_14 [2] : vector<2x8x8xf32> to vector<2x8xf32>
    %37 = vector.shape_cast %36 : vector<2x8xf32> to vector<2x8x1xf32>
    %38 = vector.broadcast %37 : vector<2x8x1xf32> to vector<2x8x8xf32>
    %39 = arith.subf %35, %38 : vector<2x8x8xf32>
    %40 = math.exp %39 : vector<2x8x8xf32>
    %cst_15 = arith.constant dense<0.000000e+00> : vector<2x8xf32>
    %41 = vector.multi_reduction <add>, %40, %cst_15 [2] : vector<2x8x8xf32> to vector<2x8xf32>
    %42 = vector.shape_cast %41 : vector<2x8xf32> to vector<2x8x1xf32>
    %43 = tpu.reciprocal %42 {approx = true} : vector<2x8x1xf32> -> vector<2x8x1xf32>
    %44 = vector.broadcast %43 : vector<2x8x1xf32> to vector<2x8x8xf32>
    %45 = arith.mulf %40, %44 : vector<2x8x8xf32>
    %cst_16 = arith.constant dense<0.000000e+00> : vector<2x8x32xf32>
    %46 = tpu.matmul %45, %34, %cst_16 {dimension_numbers = #tpu.dot_dimension_numbers<[2], [1], [1], [2], [0, 0, 0, 1, 1, 2], [0], [0]>} : vector<2x8x8xf32>, vector<2x8x32xf32>, vector<2x8x32xf32> -> vector<2x8x32xf32>
    %47 = vector.shape_cast %46 : vector<2x8x32xf32> to vector<16x32xf32>
    %c32 = arith.constant 32 : index
    %c0_17 = arith.constant 0 : index
    %48 = vector.load %arg3[%c32, %c0_17] : memref<128x32xf32, #tpu.memory_space<vmem>>, vector<32x32xf32>
    %cst_18 = arith.constant dense<0.000000e+00> : vector<16x32xf32>
    %49 = tpu.matmul %47, %48, %cst_18 {dimension_numbers = #tpu.dot_dimension_numbers<[1], [0], [0], [1], [0, 0, 1, 1], [], []>} : vector<16x32xf32>, vector<32x32xf32>, vector<16x32xf32> -> vector<16x32xf32>
    %50 = arith.addf %31, %49 : vector<16x32xf32>
    %51 = vector.extract_strided_slice %7 {offsets = [0, 0, 64], sizes = [2, 8, 32], strides = [1, 1, 1]} : vector<2x8x128xf32> to vector<2x8x32xf32>
    %52 = vector.extract_strided_slice %9 {offsets = [0, 0, 64], sizes = [2, 8, 32], strides = [1, 1, 1]} : vector<2x8x128xf32> to vector<2x8x32xf32>
    %53 = vector.extract_strided_slice %11 {offsets = [0, 0, 64], sizes = [2, 8, 32], strides = [1, 1, 1]} : vector<2x8x128xf32> to vector<2x8x32xf32>
    %cst_19 = arith.constant dense<0.000000e+00> : vector<2x8x8xf32>
    %54 = tpu.matmul %51, %52, %cst_19 {dimension_numbers = #tpu.dot_dimension_numbers<[2], [2], [1], [1], [0, 0, 0, 1, 1, 1], [0], [0]>} : vector<2x8x32xf32>, vector<2x8x32xf32>, vector<2x8x8xf32> -> vector<2x8x8xf32>
    %cst_20 = arith.constant dense<0xFF800000> : vector<2x8xf32>
    %55 = vector.multi_reduction <maximumf>, %54, %cst_20 [2] : vector<2x8x8xf32> to vector<2x8xf32>
    %56 = vector.shape_cast %55 : vector<2x8xf32> to vector<2x8x1xf32>
    %57 = vector.broadcast %56 : vector<2x8x1xf32> to vector<2x8x8xf32>
    %58 = arith.subf %54, %57 : vector<2x8x8xf32>
    %59 = math.exp %58 : vector<2x8x8xf32>
    %cst_21 = arith.constant dense<0.000000e+00> : vector<2x8xf32>
    %60 = vector.multi_reduction <add>, %59, %cst_21 [2] : vector<2x8x8xf32> to vector<2x8xf32>
    %61 = vector.shape_cast %60 : vector<2x8xf32> to vector<2x8x1xf32>
    %62 = tpu.reciprocal %61 {approx = true} : vector<2x8x1xf32> -> vector<2x8x1xf32>
    %63 = vector.broadcast %62 : vector<2x8x1xf32> to vector<2x8x8xf32>
    %64 = arith.mulf %59, %63 : vector<2x8x8xf32>
    %cst_22 = arith.constant dense<0.000000e+00> : vector<2x8x32xf32>
    %65 = tpu.matmul %64, %53, %cst_22 {dimension_numbers = #tpu.dot_dimension_numbers<[2], [1], [1], [2], [0, 0, 0, 1, 1, 2], [0], [0]>} : vector<2x8x8xf32>, vector<2x8x32xf32>, vector<2x8x32xf32> -> vector<2x8x32xf32>
    %66 = vector.shape_cast %65 : vector<2x8x32xf32> to vector<16x32xf32>
    %c64 = arith.constant 64 : index
    %c0_23 = arith.constant 0 : index
    %67 = vector.load %arg3[%c64, %c0_23] : memref<128x32xf32, #tpu.memory_space<vmem>>, vector<32x32xf32>
    %cst_24 = arith.constant dense<0.000000e+00> : vector<16x32xf32>
    %68 = tpu.matmul %66, %67, %cst_24 {dimension_numbers = #tpu.dot_dimension_numbers<[1], [0], [0], [1], [0, 0, 1, 1], [], []>} : vector<16x32xf32>, vector<32x32xf32>, vector<16x32xf32> -> vector<16x32xf32>
    %69 = arith.addf %50, %68 : vector<16x32xf32>
    %70 = vector.extract_strided_slice %7 {offsets = [0, 0, 96], sizes = [2, 8, 32], strides = [1, 1, 1]} : vector<2x8x128xf32> to vector<2x8x32xf32>
    %71 = vector.extract_strided_slice %9 {offsets = [0, 0, 96], sizes = [2, 8, 32], strides = [1, 1, 1]} : vector<2x8x128xf32> to vector<2x8x32xf32>
    %72 = vector.extract_strided_slice %11 {offsets = [0, 0, 96], sizes = [2, 8, 32], strides = [1, 1, 1]} : vector<2x8x128xf32> to vector<2x8x32xf32>
    %cst_25 = arith.constant dense<0.000000e+00> : vector<2x8x8xf32>
    %73 = tpu.matmul %70, %71, %cst_25 {dimension_numbers = #tpu.dot_dimension_numbers<[2], [2], [1], [1], [0, 0, 0, 1, 1, 1], [0], [0]>} : vector<2x8x32xf32>, vector<2x8x32xf32>, vector<2x8x8xf32> -> vector<2x8x8xf32>
    %cst_26 = arith.constant dense<0xFF800000> : vector<2x8xf32>
    %74 = vector.multi_reduction <maximumf>, %73, %cst_26 [2] : vector<2x8x8xf32> to vector<2x8xf32>
    %75 = vector.shape_cast %74 : vector<2x8xf32> to vector<2x8x1xf32>
    %76 = vector.broadcast %75 : vector<2x8x1xf32> to vector<2x8x8xf32>
    %77 = arith.subf %73, %76 : vector<2x8x8xf32>
    %78 = math.exp %77 : vector<2x8x8xf32>
    %cst_27 = arith.constant dense<0.000000e+00> : vector<2x8xf32>
    %79 = vector.multi_reduction <add>, %78, %cst_27 [2] : vector<2x8x8xf32> to vector<2x8xf32>
    %80 = vector.shape_cast %79 : vector<2x8xf32> to vector<2x8x1xf32>
    %81 = tpu.reciprocal %80 {approx = true} : vector<2x8x1xf32> -> vector<2x8x1xf32>
    %82 = vector.broadcast %81 : vector<2x8x1xf32> to vector<2x8x8xf32>
    %83 = arith.mulf %78, %82 : vector<2x8x8xf32>
    %cst_28 = arith.constant dense<0.000000e+00> : vector<2x8x32xf32>
    %84 = tpu.matmul %83, %72, %cst_28 {dimension_numbers = #tpu.dot_dimension_numbers<[2], [1], [1], [2], [0, 0, 0, 1, 1, 2], [0], [0]>} : vector<2x8x8xf32>, vector<2x8x32xf32>, vector<2x8x32xf32> -> vector<2x8x32xf32>
    %85 = vector.shape_cast %84 : vector<2x8x32xf32> to vector<16x32xf32>
    %c96 = arith.constant 96 : index
    %c0_29 = arith.constant 0 : index
    %86 = vector.load %arg3[%c96, %c0_29] : memref<128x32xf32, #tpu.memory_space<vmem>>, vector<32x32xf32>
    %cst_30 = arith.constant dense<0.000000e+00> : vector<16x32xf32>
    %87 = tpu.matmul %85, %86, %cst_30 {dimension_numbers = #tpu.dot_dimension_numbers<[1], [0], [0], [1], [0, 0, 1, 1], [], []>} : vector<16x32xf32>, vector<32x32xf32>, vector<16x32xf32> -> vector<16x32xf32>
    %88 = arith.addf %69, %87 : vector<16x32xf32>
    %c0_31 = arith.constant 0 : index
    %c0_32 = arith.constant 0 : index
    %89 = vector.load %arg4[%c0_31, %c0_32] : memref<1x32xf32, #tpu.memory_space<vmem>>, vector<1x32xf32>
    %90 = vector.broadcast %89 : vector<1x32xf32> to vector<16x32xf32>
    %91 = arith.addf %88, %90 : vector<16x32xf32>
    %c0_33 = arith.constant 0 : index
    %c0_34 = arith.constant 0 : index
    %92 = vector.load %arg5[%c0_33, %c0_34] : memref<16x32xf32, #tpu.memory_space<vmem>>, vector<16x32xf32>
    tpu.vector_store %arg5[%c0_33, %c0_34], %91 {strides = array<i32>} : memref<16x32xf32, #tpu.memory_space<vmem>>, vector<16x32xf32>,
    return
  }
}

</mosaic_0001>

<llo_original>
// kernel: tpu_custom_call.1
$region0: #{tpu_custom_call.1}
  #allocation0 [shape = 'u32[]', space=smem, size = 0x4, offset = 0x4, fixed_abs, tag = 'smem constant byte address 0x4 - core index']
  #allocation1 [shape = 'u32[144,128]{1,0:T(1,128)}', space=vmem, size = 0x12000, scoped, tag = 'internal scratch']
  %s0 = inlined_call_operand.vmem [shape: f32[16,32], index: 0, kind: input, shape index: {}]
  %s1 = inlined_call_operand.vmem [shape: f32[32,384], index: 1, kind: input, shape index: {}]
  %s2 = inlined_call_operand.vmem [shape: f32[1,384], index: 2, kind: input, shape index: {}]
  %s3 = inlined_call_operand.vmem [shape: f32[128,32], index: 3, kind: input, shape index: {}]
  %s4 = inlined_call_operand.vmem [shape: f32[1,32], index: 4, kind: input, shape index: {}]
  %s5 = inlined_call_operand.hbm [shape: f32[16,32], index: 5, kind: output, shape index: {}]
  %s6 = sld [smem:[#allocation0]]
  $region30: #{tpu_custom_call.1} parent=0
    _
  %s8 = ssub.s32 1, %s6
  %s9 = scalar_select 0, %s8, %s6
  $region1: #{tpu_custom_call.1} parent=0
    #allocation2 [shape = 'u8[8192]{0}', space=vmem, size = 0x2000, scoped, tag = 'output window, operand 0, single buffered']
    #allocation3 [shape = 's32[1]{0}', space=sflag, size = 0x4, scoped, tag = 'scoped memory for tpu_custom_call.1']
    %10 = vsyncpa [#allocation3], 0
    // Predicated region
    $region2: #{tpu_custom_call.1} parent=1 // pred_check
      _
    $region3: #{tpu_custom_call.1} parent=1 // pred_check_branch
      %12 = sbr.rel (0) target = $region5
    $region4: #{tpu_custom_call.1} parent=1 // pred_region
      _
    $region5: #{tpu_custom_call.1} parent=1 // pred_fallthru
      _
    // Predicated region
    $region6: #{tpu_custom_call.1} parent=1 // pred_check
      _
    $region7: #{tpu_custom_call.1} parent=1 // pred_check_branch
      %14 = sbr.rel (0) target = $region9
    $region8: #{tpu_custom_call.1} parent=1 // pred_region
      _
    $region9: #{tpu_custom_call.1} parent=1 // pred_fallthru
      _
    // Predicated region
    $region10: #{tpu_custom_call.1} parent=1 // pred_check
      _
    $region11: #{tpu_custom_call.1} parent=1 // pred_check_branch
      %16 = sbr.rel (0) target = $region13
    $region12: #{tpu_custom_call.1} parent=1 // pred_region
      _
    $region13: #{tpu_custom_call.1} parent=1 // pred_fallthru
      _
    // Predicated region
    $region14: #{tpu_custom_call.1} parent=1 // pred_check
      _
    $region15: #{tpu_custom_call.1} parent=1 // pred_check_branch
      %18 = sbr.rel (0) target = $region17
    $region16: #{tpu_custom_call.1} parent=1 // pred_region
      _
    $region17: #{tpu_custom_call.1} parent=1 // pred_fallthru
      _
    // Predicated region
    $region18: #{tpu_custom_call.1} parent=1 // pred_check
      _
    $region19: #{tpu_custom_call.1} parent=1 // pred_check_branch
      %20 = sbr.rel (0) target = $region21
    $region20: #{tpu_custom_call.1} parent=1 // pred_region
      _
    $region21: #{tpu_custom_call.1} parent=1 // pred_fallthru
      _
    %v21 = vld [vmem:[%s0] sm:$0xff]
    %v22 = vld [vmem:[%s0 + $0x8] sm:$0xff]
    %v23 = vld [vmem:[%s1] sm:$0xff]
    %v24 = vld [vmem:[%s1 + $0x8] sm:$0xff]
    %v25 = vld [vmem:[%s1 + $0x10] sm:$0xff]
    %v26 = vld [vmem:[%s1 + $0x18] sm:$0xff]
    %v27 = vld [vmem:[%s1 + $0x20] sm:$0xff]
    %v28 = vld [vmem:[%s1 + $0x28] sm:$0xff]
    %v29 = vld [vmem:[%s1 + $0x30] sm:$0xff]
    %v30 = vld [vmem:[%s1 + $0x38] sm:$0xff]
    %v31 = vld [vmem:[%s1 + $0x40] sm:$0xff]
    %v32 = vld [vmem:[%s1 + $0x48] sm:$0xff]
    %v33 = vld [vmem:[%s1 + $0x50] sm:$0xff]
    %v34 = vld [vmem:[%s1 + $0x58] sm:$0xff]
    %v35 = vld [vmem:[%s2] sm:$0x7]
    %v37 = vlaneseq
    %v38 = vshrl.u32 %v37, 7
    %v39 = vsub.s32 0, %v38
    %v40 = vrot.slane %v35, %v39
    %v41 = vlaneseq
    %v42 = vshrl.u32 %v41, 7
    %v43 = vsub.s32 1, %v42
    %v44 = vrot.slane %v35, %v43
    %v45 = vlaneseq
    %v46 = vshrl.u32 %v45, 7
    %v47 = vsub.s32 2, %v46
    %v48 = vrot.slane %v35, %v47
    %vm52 = vcmask 261120
    %v54 = vsel %vm52, %v21, 0
    %v57 = vsel %vm52, %v22, 0
    %59 = vmatprep.subr.mxu0 %v24
    %60 = vmatpush1.msra.mxu0 %v23
    %61 = vmatprep.subr.mxu0 %v27
    %62 = vmatpush1.msra.mxu0 %v26
    %63 = vmatprep.subr.mxu0 %v30
    %64 = vmatpush1.msra.mxu0 %v29
    %65 = vmatprep.subr.mxu0 %v33
    %66 = vmatpush1.msra.mxu0 %v32
    %67 = vmatprep.subr.mxu0 0.0
    %68 = vmatpush1.msra.mxu0 0.0
    %69 = vmatprep.subr.mxu0 0.0
    %70 = vmatpush1.msra.mxu0 0.0
    %71 = vmatprep.subr.mxu0 0.0
    %72 = vmatpush1.msra.mxu0 0.0
    %73 = vmatprep.subr.mxu0 0.0
    %74 = vmatpush1.msra.mxu0 0.0
    %75 = vmatprep.subr.mxu0 0.0
    %76 = vmatpush1.msra.mxu0 0.0
    %77 = vmatprep.subr.mxu0 0.0
    %78 = vmatpush1.msra.mxu0 0.0
    %79 = vmatprep.subr.mxu0 0.0
    %80 = vmatpush1.msra.mxu0 0.0
    %81 = vmatprep.subr.mxu0 0.0
    %82 = vmatpush1.msra.mxu0 0.0
    %83 = vmatprep.subr.mxu0 0.0
    %84 = vmatpush1.msra.mxu0 0.0
    %85 = vmatprep.subr.mxu0 0.0
    %86 = vmatpush1.msra.mxu0 0.0
    %87 = vmatprep.subr.mxu0 0.0
    %88 = vmatpush1.msra.mxu0 0.0
    %89 = vmatprep.subr.mxu0 0.0
    %90 = vmatpush1.msra.mxu0 0.0
    %91 = vmatprep.subr.mxu0 0.0
    %92 = vmatpush1.msra.mxu0 0.0
    %93 = vmatprep.subr.mxu0 0.0
    %94 = vmatpush1.msra.mxu0 0.0
    %95 = vmatprep.subr.mxu0 0.0
    %96 = vmatpush1.msra.mxu0 0.0
    %97 = vmatprep.subr.mxu0 0.0
    %98 = vmatpush1.msra.mxu0 0.0
    %99 = vmatprep.subr.mxu0 0.0
    %100 = vmatpush1.msra.mxu0 0.0
    %101 = vmatprep.subr.mxu0 0.0
    %102 = vmatpush1.msra.mxu0 0.0
    %103 = vmatprep.subr.mxu0 0.0
    %104 = vmatpush1.msra.mxu0 0.0
    %105 = vmatprep.subr.mxu0 0.0
    %106 = vmatpush1.msra.mxu0 0.0
    %107 = vmatprep.subr.mxu0 0.0
    %108 = vmatpush1.msra.mxu0 0.0
    %109 = vmatprep.subr.mxu0 0.0
    %110 = vmatpush1.msra.mxu0 0.0
    %111 = vmatprep.subr.mxu0 0.0
    %112 = vmatpush1.msra.mxu0 0.0
    %113 = vmatprep.subr.mxu0 0.0
    %114 = vmatpush1.msra.mxu0 0.0
    %115 = vmatprep.subr.mxu0 0.0
    %116 = vmatpush1.msra.mxu0 0.0
    %117 = vmatprep.subr.mxu0 0.0
    %118 = vmatpush1.msra.mxu0 0.0
    %119 = vmatprep.subr.mxu0 0.0
    %120 = vmatpush1.msra.mxu0 0.0
    %121 = vmatprep.subr.mxu0 0.0
    %122 = vmatpush1.msra.mxu0 0.0
    %123 = vmatprep.mubr.f32.mxu0 0.0
    %124 = vmatmul.mubr.f32.gmra.mrb[0].mxu0 %v54
    %v125 = vpop.f32.mrb[0].mxu0
    %v126 = vadd.f32 %v40, %v125
    %v127 = vpop.f32.mrb[0].mxu0
    %v128 = vadd.f32 %v44, %v127
    %129 = vmatprep.mubr.f32.mxu0 0.0
    %130 = vmatmul.mubr.f32.gmra.mrb[0].mxu0 %v57
    %v131 = vpop.f32.mrb[0].mxu0
    %v132 = vadd.f32 %v40, %v131
    %v133 = vpop.f32.mrb[0].mxu0
    %v134 = vadd.f32 %v44, %v133
    %135 = vdwg.mxu0
    %136 = vmatprep.subr.mxu0 0.0
    %137 = vmatpush1.msra.mxu0 %v25
    %138 = vmatprep.subr.mxu0 0.0
    %139 = vmatpush1.msra.mxu0 %v28
    %140 = vmatprep.subr.mxu0 0.0
    %141 = vmatpush1.msra.mxu0 %v31
    %142 = vmatprep.subr.mxu0 0.0
    %143 = vmatpush1.msra.mxu0 %v34
    %144 = vmatprep.subr.mxu0 0.0
    %145 = vmatpush1.msra.mxu0 0.0
    %146 = vmatprep.subr.mxu0 0.0
    %147 = vmatpush1.msra.mxu0 0.0
    %148 = vmatprep.subr.mxu0 0.0
    %149 = vmatpush1.msra.mxu0 0.0
    %150 = vmatprep.subr.mxu0 0.0
    %151 = vmatpush1.msra.mxu0 0.0
    %152 = vmatprep.subr.mxu0 0.0
    %153 = vmatpush1.msra.mxu0 0.0
    %154 = vmatprep.subr.mxu0 0.0
    %155 = vmatpush1.msra.mxu0 0.0
    %156 = vmatprep.subr.mxu0 0.0
    %157 = vmatpush1.msra.mxu0 0.0
    %158 = vmatprep.subr.mxu0 0.0
    %159 = vmatpush1.msra.mxu0 0.0
    %160 = vmatprep.subr.mxu0 0.0
    %161 = vmatpush1.msra.mxu0 0.0
    %162 = vmatprep.subr.mxu0 0.0
    %163 = vmatpush1.msra.mxu0 0.0
    %164 = vmatprep.subr.mxu0 0.0
    %165 = vmatpush1.msra.mxu0 0.0
    %166 = vmatprep.subr.mxu0 0.0
    %167 = vmatpush1.msra.mxu0 0.0
    %168 = vmatprep.subr.mxu0 0.0
    %169 = vmatpush1.msra.mxu0 0.0
    %170 = vmatprep.subr.mxu0 0.0
    %171 = vmatpush1.msra.mxu0 0.0
    %172 = vmatprep.subr.mxu0 0.0
    %173 = vmatpush1.msra.mxu0 0.0
    %174 = vmatprep.subr.mxu0 0.0
    %175 = vmatpush1.msra.mxu0 0.0
    %176 = vmatprep.subr.mxu0 0.0
    %177 = vmatpush1.msra.mxu0 0.0
    %178 = vmatprep.subr.mxu0 0.0
    %179 = vmatpush1.msra.mxu0 0.0
    %180 = vmatprep.subr.mxu0 0.0
    %181 = vmatpush1.msra.mxu0 0.0
    %182 = vmatprep.subr.mxu0 0.0
    %183 = vmatpush1.msra.mxu0 0.0
    %184 = vmatprep.subr.mxu0 0.0
    %185 = vmatpush1.msra.mxu0 0.0
    %186 = vmatprep.subr.mxu0 0.0
    %187 = vmatpush1.msra.mxu0 0.0
    %188 = vmatprep.subr.mxu0 0.0
    %189 = vmatpush1.msra.mxu0 0.0
    %190 = vmatprep.subr.mxu0 0.0
    %191 = vmatpush1.msra.mxu0 0.0
    %192 = vmatprep.subr.mxu0 0.0
    %193 = vmatpush1.msra.mxu0 0.0
    %194 = vmatprep.subr.mxu0 0.0
    %195 = vmatpush1.msra.mxu0 0.0
    %196 = vmatprep.subr.mxu0 0.0
    %197 = vmatpush1.msra.mxu0 0.0
    %198 = vmatprep.subr.mxu0 0.0
    %199 = vmatpush1.msra.mxu0 0.0
    %200 = vmatprep.mubr.f32.mxu0 0.0
    %201 = vmatmul.mubr.f32.gmra.mrb[0].mxu0 %v54
    %v202 = vpop.f32.mrb[0].mxu0
    %v203 = vadd.f32 %v48, %v202
    %v204 = vpop.f32.mrb[0].mxu0
    %205 = vmatprep.mubr.f32.mxu0 0.0
    %206 = vmatmul.mubr.f32.gmra.mrb[0].mxu0 %v57
    %v207 = vpop.f32.mrb[0].mxu0
    %v208 = vadd.f32 %v48, %v207
    %v209 = vpop.f32.mrb[0].mxu0
    %210 = vdwg.mxu0
    %v212 = vsel %vm52, %v126, 0
    %v215 = vsel %vm52, %v128, 0
    %217 = vmatprep.subr.mxu0 0.0
    %218 = vmatpush1.xpose.msra.mxu0 %v215
    %219 = vmatprep.subr.mxu0 0.0
    %220 = vmatpush1.xpose.msra.mxu0 0.0
    %221 = vmatprep.subr.mxu0 0.0
    %222 = vmatpush1.xpose.msra.mxu0 0.0
    %223 = vmatprep.subr.mxu0 0.0
    %224 = vmatpush1.xpose.msra.mxu0 0.0
    %225 = vmatprep.subr.mxu0 0.0
    %226 = vmatpush1.xpose.msra.mxu0 0.0
    %227 = vmatprep.subr.mxu0 0.0
    %228 = vmatpush1.xpose.msra.mxu0 0.0
    %229 = vmatprep.subr.mxu0 0.0
    %230 = vmatpush1.xpose.msra.mxu0 0.0
    %231 = vmatprep.subr.mxu0 0.0
    %232 = vmatpush1.xpose.msra.mxu0 0.0
    %233 = vmatprep.subr.mxu0 0.0
    %234 = vmatpush1.xpose.msra.mxu0 0.0
    %235 = vmatprep.subr.mxu0 0.0
    %236 = vmatpush1.xpose.msra.mxu0 0.0
    %237 = vmatprep.subr.mxu0 0.0
    %238 = vmatpush1.xpose.msra.mxu0 0.0
    %239 = vmatprep.subr.mxu0 0.0
    %240 = vmatpush1.xpose.msra.mxu0 0.0
    %241 = vmatprep.subr.mxu0 0.0
    %242 = vmatpush1.xpose.msra.mxu0 0.0
    %243 = vmatprep.subr.mxu0 0.0
    %244 = vmatpush1.xpose.msra.mxu0 0.0
    %245 = vmatprep.subr.mxu0 0.0
    %246 = vmatpush1.xpose.msra.mxu0 0.0
    %247 = vmatprep.subr.mxu0 0.0
    %248 = vmatpush1.xpose.msra.mxu0 0.0
    %249 = vmatprep.subr.mxu0 0.0
    %250 = vmatpush1.xpose.msra.mxu0 0.0
    %251 = vmatprep.subr.mxu0 0.0
    %252 = vmatpush1.xpose.msra.mxu0 0.0
    %253 = vmatprep.subr.mxu0 0.0
    %254 = vmatpush1.xpose.msra.mxu0 0.0
    %255 = vmatprep.subr.mxu0 0.0
    %256 = vmatpush1.xpose.msra.mxu0 0.0
    %257 = vmatprep.subr.mxu0 0.0
    %258 = vmatpush1.xpose.msra.mxu0 0.0
    %259 = vmatprep.subr.mxu0 0.0
    %260 = vmatpush1.xpose.msra.mxu0 0.0
    %261 = vmatprep.subr.mxu0 0.0
    %262 = vmatpush1.xpose.msra.mxu0 0.0
    %263 = vmatprep.subr.mxu0 0.0
    %264 = vmatpush1.xpose.msra.mxu0 0.0
    %265 = vmatprep.subr.mxu0 0.0
    %266 = vmatpush1.xpose.msra.mxu0 0.0
    %267 = vmatprep.subr.mxu0 0.0
    %268 = vmatpush1.xpose.msra.mxu0 0.0
    %269 = vmatprep.subr.mxu0 0.0
    %270 = vmatpush1.xpose.msra.mxu0 0.0
    %271 = vmatprep.subr.mxu0 0.0
    %272 = vmatpush1.xpose.msra.mxu0 0.0
    %273 = vmatprep.subr.mxu0 0.0
    %274 = vmatpush1.xpose.msra.mxu0 0.0
    %275 = vmatprep.subr.mxu0 0.0
    %276 = vmatpush1.xpose.msra.mxu0 0.0
    %277 = vmatprep.subr.mxu0 0.0
    %278 = vmatpush1.xpose.msra.mxu0 0.0
    %279 = vmatprep.subr.mxu0 0.0
    %280 = vmatpush1.xpose.msra.mxu0 0.0
    %281 = vmatprep.mubr.f32.mxu0 0.0
    %282 = vmatmul.mubr.f32.gmra.mrb[0].mxu0 %v212
    %v283 = vpop.f32.mrb[0].mxu0
    %v284 = vadd.f32 0.0, %v283
    %v285 = vpop.f32.mrb[0].mxu0
    %286 = vdwg.mxu0
    %v288 = vsel %vm52, %v132, 0
    %v291 = vsel %vm52, %v134, 0
    %293 = vmatprep.subr.mxu0 0.0
    %294 = vmatpush1.xpose.msra.mxu0 %v291
    %295 = vmatprep.subr.mxu0 0.0
    %296 = vmatpush1.xpose.msra.mxu0 0.0
    %297 = vmatprep.subr.mxu0 0.0
    %298 = vmatpush1.xpose.msra.mxu0 0.0
    %299 = vmatprep.subr.mxu0 0.0
    %300 = vmatpush1.xpose.msra.mxu0 0.0
    %301 = vmatprep.subr.mxu0 0.0
    %302 = vmatpush1.xpose.msra.mxu0 0.0
    %303 = vmatprep.subr.mxu0 0.0
    %304 = vmatpush1.xpose.msra.mxu0 0.0
    %305 = vmatprep.subr.mxu0 0.0
    %306 = vmatpush1.xpose.msra.mxu0 0.0
    %307 = vmatprep.subr.mxu0 0.0
    %308 = vmatpush1.xpose.msra.mxu0 0.0
    %309 = vmatprep.subr.mxu0 0.0
    %310 = vmatpush1.xpose.msra.mxu0 0.0
    %311 = vmatprep.subr.mxu0 0.0
    %312 = vmatpush1.xpose.msra.mxu0 0.0
    %313 = vmatprep.subr.mxu0 0.0
    %314 = vmatpush1.xpose.msra.mxu0 0.0
    %315 = vmatprep.subr.mxu0 0.0
    %316 = vmatpush1.xpose.msra.mxu0 0.0
    %317 = vmatprep.subr.mxu0 0.0
    %318 = vmatpush1.xpose.msra.mxu0 0.0
    %319 = vmatprep.subr.mxu0 0.0
    %320 = vmatpush1.xpose.msra.mxu0 0.0
    %321 = vmatprep.subr.mxu0 0.0
    %322 = vmatpush1.xpose.msra.mxu0 0.0
    %323 = vmatprep.subr.mxu0 0.0
    %324 = vmatpush1.xpose.msra.mxu0 0.0
    %325 = vmatprep.subr.mxu0 0.0
    %326 = vmatpush1.xpose.msra.mxu0 0.0
    %327 = vmatprep.subr.mxu0 0.0
    %328 = vmatpush1.xpose.msra.mxu0 0.0
    %329 = vmatprep.subr.mxu0 0.0
    %330 = vmatpush1.xpose.msra.mxu0 0.0
    %331 = vmatprep.subr.mxu0 0.0
    %332 = vmatpush1.xpose.msra.mxu0 0.0
    %333 = vmatprep.subr.mxu0 0.0
    %334 = vmatpush1.xpose.msra.mxu0 0.0
    %335 = vmatprep.subr.mxu0 0.0
    %336 = vmatpush1.xpose.msra.mxu0 0.0
    %337 = vmatprep.subr.mxu0 0.0
    %338 = vmatpush1.xpose.msra.mxu0 0.0
    %339 = vmatprep.subr.mxu0 0.0
    %340 = vmatpush1.xpose.msra.mxu0 0.0
    %341 = vmatprep.subr.mxu0 0.0
    %342 = vmatpush1.xpose.msra.mxu0 0.0
    %343 = vmatprep.subr.mxu0 0.0
    %344 = vmatpush1.xpose.msra.mxu0 0.0
    %345 = vmatprep.subr.mxu0 0.0
    %346 = vmatpush1.xpose.msra.mxu0 0.0
    %347 = vmatprep.subr.mxu0 0.0
    %348 = vmatpush1.xpose.msra.mxu0 0.0
    %349 = vmatprep.subr.mxu0 0.0
    %350 = vmatpush1.xpose.msra.mxu0 0.0
    %351 = vmatprep.subr.mxu0 0.0
    %352 = vmatpush1.xpose.msra.mxu0 0.0
    %353 = vmatprep.subr.mxu0 0.0
    %354 = vmatpush1.xpose.msra.mxu0 0.0
    %355 = vmatprep.subr.mxu0 0.0
    %356 = vmatpush1.xpose.msra.mxu0 0.0
    %357 = vmatprep.mubr.f32.mxu0 0.0
    %358 = vmatmul.mubr.f32.gmra.mrb[0].mxu0 %v288
    %v359 = vpop.f32.mrb[0].mxu0
    %v360 = vadd.f32 0.0, %v359
    %v361 = vpop.f32.mrb[0].mxu0
    %362 = vdwg.mxu0
    %vm363 = vcmask 64512
    %v364 = vsel %vm363, %v284, -inf
    %365 = vmax.xlane.f32.xlu0 %v364
    %v366 = vpop.xlane.xlu0 %365
    %v367 = vsel %vm363, %v360, -inf
    %368 = vmax.xlane.f32.xlu0 %v367
    %v369 = vpop.xlane.xlu0 %368
    %v370 = vsub.f32 %v284, %v366
    %v371 = vsub.f32 %v360, %v369
    %v372 = vmul.f32 %v370, 1.442695
    %v373 = vpow.pop %v372
    %v374 = vmul.f32 %v371, 1.442695
    %v375 = vpow.pop %v374
    %v376 = vsel %vm363, %v373, 0.0
    %377 = vadd.xlane.f32.xlu0 %v376
    %v378 = vpop.xlane.xlu0 %377
    %v379 = vsel %vm363, %v375, 0.0
    %380 = vadd.xlane.f32.xlu0 %v379
    %v381 = vpop.xlane.xlu0 %380
    %v382 = vrcp.pop %v378
    %v383 = vrcp.pop %v381
    %v384 = vmul.f32 %v373, %v382
    %v385 = vmul.f32 %v375, %v383
    %v387 = vsel %vm363, %v384, 0
    %389 = vmatprep.subr.mxu0 0.0
    %390 = vmatpush1.msra.mxu0 %v203
    %391 = vmatprep.subr.mxu0 0.0
    %392 = vmatpush1.msra.mxu0 0.0
    %393 = vmatprep.subr.mxu0 0.0
    %394 = vmatpush1.msra.mxu0 0.0
    %395 = vmatprep.subr.mxu0 0.0
    %396 = vmatpush1.msra.mxu0 0.0
    %397 = vmatprep.subr.mxu0 0.0
    %398 = vmatpush1.msra.mxu0 0.0
    %399 = vmatprep.subr.mxu0 0.0
    %400 = vmatpush1.msra.mxu0 0.0
    %401 = vmatprep.subr.mxu0 0.0
    %402 = vmatpush1.msra.mxu0 0.0
    %403 = vmatprep.subr.mxu0 0.0
    %404 = vmatpush1.msra.mxu0 0.0
    %405 = vmatprep.subr.mxu0 0.0
    %406 = vmatpush1.msra.mxu0 0.0
    %407 = vmatprep.subr.mxu0 0.0
    %408 = vmatpush1.msra.mxu0 0.0
    %409 = vmatprep.subr.mxu0 0.0
    %410 = vmatpush1.msra.mxu0 0.0
    %411 = vmatprep.subr.mxu0 0.0
    %412 = vmatpush1.msra.mxu0 0.0
    %413 = vmatprep.subr.mxu0 0.0
    %414 = vmatpush1.msra.mxu0 0.0
    %415 = vmatprep.subr.mxu0 0.0
    %416 = vmatpush1.msra.mxu0 0.0
    %417 = vmatprep.subr.mxu0 0.0
    %418 = vmatpush1.msra.mxu0 0.0
    %419 = vmatprep.subr.mxu0 0.0
    %420 = vmatpush1.msra.mxu0 0.0
    %421 = vmatprep.subr.mxu0 0.0
    %422 = vmatpush1.msra.mxu0 0.0
    %423 = vmatprep.subr.mxu0 0.0
    %424 = vmatpush1.msra.mxu0 0.0
    %425 = vmatprep.subr.mxu0 0.0
    %426 = vmatpush1.msra.mxu0 0.0
    %427 = vmatprep.subr.mxu0 0.0
    %428 = vmatpush1.msra.mxu0 0.0
    %429 = vmatprep.subr.mxu0 0.0
    %430 = vmatpush1.msra.mxu0 0.0
    %431 = vmatprep.subr.mxu0 0.0
    %432 = vmatpush1.msra.mxu0 0.0
    %433 = vmatprep.subr.mxu0 0.0
    %434 = vmatpush1.msra.mxu0 0.0
    %435 = vmatprep.subr.mxu0 0.0
    %436 = vmatpush1.msra.mxu0 0.0
    %437 = vmatprep.subr.mxu0 0.0
    %438 = vmatpush1.msra.mxu0 0.0
    %439 = vmatprep.subr.mxu0 0.0
    %440 = vmatpush1.msra.mxu0 0.0
    %441 = vmatprep.subr.mxu0 0.0
    %442 = vmatpush1.msra.mxu0 0.0
    %443 = vmatprep.subr.mxu0 0.0
    %444 = vmatpush1.msra.mxu0 0.0
    %445 = vmatprep.subr.mxu0 0.0
    %446 = vmatpush1.msra.mxu0 0.0
    %447 = vmatprep.subr.mxu0 0.0
    %448 = vmatpush1.msra.mxu0 0.0
    %449 = vmatprep.subr.mxu0 0.0
    %450 = vmatpush1.msra.mxu0 0.0
    %451 = vmatprep.subr.mxu0 0.0
    %452 = vmatpush1.msra.mxu0 0.0
    %453 = vmatprep.mubr.f32.mxu0 0.0
    %454 = vmatmul.mubr.f32.gmra.mrb[0].mxu0 %v387
    %v455 = vpop.f32.mrb[0].mxu0
    %v456 = vadd.f32 0.0, %v455
    %v457 = vpop.f32.mrb[0].mxu0
    %458 = vdwg.mxu0
    %v460 = vsel %vm363, %v385, 0
    %462 = vmatprep.subr.mxu0 0.0
    %463 = vmatpush1.msra.mxu0 %v208
    %464 = vmatprep.subr.mxu0 0.0
    %465 = vmatpush1.msra.mxu0 0.0
    %466 = vmatprep.subr.mxu0 0.0
    %467 = vmatpush1.msra.mxu0 0.0
    %468 = vmatprep.subr.mxu0 0.0
    %469 = vmatpush1.msra.mxu0 0.0
    %470 = vmatprep.subr.mxu0 0.0
    %471 = vmatpush1.msra.mxu0 0.0
    %472 = vmatprep.subr.mxu0 0.0
    %473 = vmatpush1.msra.mxu0 0.0
    %474 = vmatprep.subr.mxu0 0.0
    %475 = vmatpush1.msra.mxu0 0.0
    %476 = vmatprep.subr.mxu0 0.0
    %477 = vmatpush1.msra.mxu0 0.0
    %478 = vmatprep.subr.mxu0 0.0
    %479 = vmatpush1.msra.mxu0 0.0
    %480 = vmatprep.subr.mxu0 0.0
    %481 = vmatpush1.msra.mxu0 0.0
    %482 = vmatprep.subr.mxu0 0.0
    %483 = vmatpush1.msra.mxu0 0.0
    %484 = vmatprep.subr.mxu0 0.0
    %485 = vmatpush1.msra.mxu0 0.0
    %486 = vmatprep.subr.mxu0 0.0
    %487 = vmatpush1.msra.mxu0 0.0
    %488 = vmatprep.subr.mxu0 0.0
    %489 = vmatpush1.msra.mxu0 0.0
    %490 = vmatprep.subr.mxu0 0.0
    %491 = vmatpush1.msra.mxu0 0.0
    %492 = vmatprep.subr.mxu0 0.0
    %493 = vmatpush1.msra.mxu0 0.0
    %494 = vmatprep.subr.mxu0 0.0
    %495 = vmatpush1.msra.mxu0 0.0
    %496 = vmatprep.subr.mxu0 0.0
    %497 = vmatpush1.msra.mxu0 0.0
    %498 = vmatprep.subr.mxu0 0.0
    %499 = vmatpush1.msra.mxu0 0.0
    %500 = vmatprep.subr.mxu0 0.0
    %501 = vmatpush1.msra.mxu0 0.0
    %502 = vmatprep.subr.mxu0 0.0
    %503 = vmatpush1.msra.mxu0 0.0
    %504 = vmatprep.subr.mxu0 0.0
    %505 = vmatpush1.msra.mxu0 0.0
    %506 = vmatprep.subr.mxu0 0.0
    %507 = vmatpush1.msra.mxu0 0.0
    %508 = vmatprep.subr.mxu0 0.0
    %509 = vmatpush1.msra.mxu0 0.0
    %510 = vmatprep.subr.mxu0 0.0
    %511 = vmatpush1.msra.mxu0 0.0
    %512 = vmatprep.subr.mxu0 0.0
    %513 = vmatpush1.msra.mxu0 0.0
    %514 = vmatprep.subr.mxu0 0.0
    %515 = vmatpush1.msra.mxu0 0.0
    %516 = vmatprep.subr.mxu0 0.0
    %517 = vmatpush1.msra.mxu0 0.0
    %518 = vmatprep.subr.mxu0 0.0
    %519 = vmatpush1.msra.mxu0 0.0
    %520 = vmatprep.subr.mxu0 0.0
    %521 = vmatpush1.msra.mxu0 0.0
    %522 = vmatprep.subr.mxu0 0.0
    %523 = vmatpush1.msra.mxu0 0.0
    %524 = vmatprep.subr.mxu0 0.0
    %525 = vmatpush1.msra.mxu0 0.0
    %526 = vmatprep.mubr.f32.mxu0 0.0
    %527 = vmatmul.mubr.f32.gmra.mrb[0].mxu0 %v460
    %v528 = vpop.f32.mrb[0].mxu0
    %v529 = vadd.f32 0.0, %v528
    %v530 = vpop.f32.mrb[0].mxu0
    %531 = vdwg.mxu0
    %v532 = vld [vmem:[%s3] sm:$0xff]
    %v533 = vld [vmem:[%s3 + $0x8] sm:$0xff]
    %v534 = vld [vmem:[%s3 + $0x10] sm:$0xff]
    %v535 = vld [vmem:[%s3 + $0x18] sm:$0xff]
    %536 = vrot.lane.b32.xlu0 %v126, 96
    %v537 = vpop.permute.xlu0 %536
    %538 = vrot.lane.b32.xlu0 %v128, 96
    %v539 = vpop.permute.xlu0 %538
    %v540 = vsel %vm52, %v537, 0
    %v542 = vsel %vm52, %v539, 0
    %544 = vmatprep.subr.mxu0 0.0
    %545 = vmatpush1.xpose.msra.mxu0 %v542
    %546 = vmatprep.subr.mxu0 0.0
    %547 = vmatpush1.xpose.msra.mxu0 0.0
    %548 = vmatprep.subr.mxu0 0.0
    %549 = vmatpush1.xpose.msra.mxu0 0.0
    %550 = vmatprep.subr.mxu0 0.0
    %551 = vmatpush1.xpose.msra.mxu0 0.0
    %552 = vmatprep.subr.mxu0 0.0
    %553 = vmatpush1.xpose.msra.mxu0 0.0
    %554 = vmatprep.subr.mxu0 0.0
    %555 = vmatpush1.xpose.msra.mxu0 0.0
    %556 = vmatprep.subr.mxu0 0.0
    %557 = vmatpush1.xpose.msra.mxu0 0.0
    %558 = vmatprep.subr.mxu0 0.0
    %559 = vmatpush1.xpose.msra.mxu0 0.0
    %560 = vmatprep.subr.mxu0 0.0
    %561 = vmatpush1.xpose.msra.mxu0 0.0
    %562 = vmatprep.subr.mxu0 0.0
    %563 = vmatpush1.xpose.msra.mxu0 0.0
    %564 = vmatprep.subr.mxu0 0.0
    %565 = vmatpush1.xpose.msra.mxu0 0.0
    %566 = vmatprep.subr.mxu0 0.0
    %567 = vmatpush1.xpose.msra.mxu0 0.0
    %568 = vmatprep.subr.mxu0 0.0
    %569 = vmatpush1.xpose.msra.mxu0 0.0
    %570 = vmatprep.subr.mxu0 0.0
    %571 = vmatpush1.xpose.msra.mxu0 0.0
    %572 = vmatprep.subr.mxu0 0.0
    %573 = vmatpush1.xpose.msra.mxu0 0.0
    %574 = vmatprep.subr.mxu0 0.0
    %575 = vmatpush1.xpose.msra.mxu0 0.0
    %576 = vmatprep.subr.mxu0 0.0
    %577 = vmatpush1.xpose.msra.mxu0 0.0
    %578 = vmatprep.subr.mxu0 0.0
    %579 = vmatpush1.xpose.msra.mxu0 0.0
    %580 = vmatprep.subr.mxu0 0.0
    %581 = vmatpush1.xpose.msra.mxu0 0.0
    %582 = vmatprep.subr.mxu0 0.0
    %583 = vmatpush1.xpose.msra.mxu0 0.0
    %584 = vmatprep.subr.mxu0 0.0
    %585 = vmatpush1.xpose.msra.mxu0 0.0
    %586 = vmatprep.subr.mxu0 0.0
    %587 = vmatpush1.xpose.msra.mxu0 0.0
    %588 = vmatprep.subr.mxu0 0.0
    %589 = vmatpush1.xpose.msra.mxu0 0.0
    %590 = vmatprep.subr.mxu0 0.0
    %591 = vmatpush1.xpose.msra.mxu0 0.0
    %592 = vmatprep.subr.mxu0 0.0
    %593 = vmatpush1.xpose.msra.mxu0 0.0
    %594 = vmatprep.subr.mxu0 0.0
    %595 = vmatpush1.xpose.msra.mxu0 0.0
    %596 = vmatprep.subr.mxu0 0.0
    %597 = vmatpush1.xpose.msra.mxu0 0.0
    %598 = vmatprep.subr.mxu0 0.0
    %599 = vmatpush1.xpose.msra.mxu0 0.0
    %600 = vmatprep.subr.mxu0 0.0
    %601 = vmatpush1.xpose.msra.mxu0 0.0
    %602 = vmatprep.subr.mxu0 0.0
    %603 = vmatpush1.xpose.msra.mxu0 0.0
    %604 = vmatprep.subr.mxu0 0.0
    %605 = vmatpush1.xpose.msra.mxu0 0.0
    %606 = vmatprep.subr.mxu0 0.0
    %607 = vmatpush1.xpose.msra.mxu0 0.0
    %608 = vmatprep.mubr.f32.mxu0 0.0
    %609 = vmatmul.mubr.f32.gmra.mrb[0].mxu0 %v540
    %v610 = vpop.f32.mrb[0].mxu0
    %v611 = vadd.f32 0.0, %v610
    %v612 = vpop.f32.mrb[0].mxu0
    %613 = vdwg.mxu0
    %614 = vrot.lane.b32.xlu0 %v132, 96
    %v615 = vpop.permute.xlu0 %614
    %616 = vrot.lane.b32.xlu0 %v134, 96
    %v617 = vpop.permute.xlu0 %616
    %v618 = vsel %vm52, %v615, 0
    %v620 = vsel %vm52, %v617, 0
    %622 = vmatprep.subr.mxu0 0.0
    %623 = vmatpush1.xpose.msra.mxu0 %v620
    %624 = vmatprep.subr.mxu0 0.0
    %625 = vmatpush1.xpose.msra.mxu0 0.0
    %626 = vmatprep.subr.mxu0 0.0
    %627 = vmatpush1.xpose.msra.mxu0 0.0
    %628 = vmatprep.subr.mxu0 0.0
    %629 = vmatpush1.xpose.msra.mxu0 0.0
    %630 = vmatprep.subr.mxu0 0.0
    %631 = vmatpush1.xpose.msra.mxu0 0.0
    %632 = vmatprep.subr.mxu0 0.0
    %633 = vmatpush1.xpose.msra.mxu0 0.0
    %634 = vmatprep.subr.mxu0 0.0
    %635 = vmatpush1.xpose.msra.mxu0 0.0
    %636 = vmatprep.subr.mxu0 0.0
    %637 = vmatpush1.xpose.msra.mxu0 0.0
    %638 = vmatprep.subr.mxu0 0.0
    %639 = vmatpush1.xpose.msra.mxu0 0.0
    %640 = vmatprep.subr.mxu0 0.0
    %641 = vmatpush1.xpose.msra.mxu0 0.0
    %642 = vmatprep.subr.mxu0 0.0
    %643 = vmatpush1.xpose.msra.mxu0 0.0
    %644 = vmatprep.subr.mxu0 0.0
    %645 = vmatpush1.xpose.msra.mxu0 0.0
    %646 = vmatprep.subr.mxu0 0.0
    %647 = vmatpush1.xpose.msra.mxu0 0.0
    %648 = vmatprep.subr.mxu0 0.0
    %649 = vmatpush1.xpose.msra.mxu0 0.0
    %650 = vmatprep.subr.mxu0 0.0
    %651 = vmatpush1.xpose.msra.mxu0 0.0
    %652 = vmatprep.subr.mxu0 0.0
    %653 = vmatpush1.xpose.msra.mxu0 0.0
    %654 = vmatprep.subr.mxu0 0.0
    %655 = vmatpush1.xpose.msra.mxu0 0.0
    %656 = vmatprep.subr.mxu0 0.0
    %657 = vmatpush1.xpose.msra.mxu0 0.0
    %658 = vmatprep.subr.mxu0 0.0
    %659 = vmatpush1.xpose.msra.mxu0 0.0
    %660 = vmatprep.subr.mxu0 0.0
    %661 = vmatpush1.xpose.msra.mxu0 0.0
    %662 = vmatprep.subr.mxu0 0.0
    %663 = vmatpush1.xpose.msra.mxu0 0.0
    %664 = vmatprep.subr.mxu0 0.0
    %665 = vmatpush1.xpose.msra.mxu0 0.0
    %666 = vmatprep.subr.mxu0 0.0
    %667 = vmatpush1.xpose.msra.mxu0 0.0
    %668 = vmatprep.subr.mxu0 0.0
    %669 = vmatpush1.xpose.msra.mxu0 0.0
    %670 = vmatprep.subr.mxu0 0.0
    %671 = vmatpush1.xpose.msra.mxu0 0.0
    %672 = vmatprep.subr.mxu0 0.0
    %673 = vmatpush1.xpose.msra.mxu0 0.0
    %674 = vmatprep.subr.mxu0 0.0
    %675 = vmatpush1.xpose.msra.mxu0 0.0
    %676 = vmatprep.subr.mxu0 0.0
    %677 = vmatpush1.xpose.msra.mxu0 0.0
    %678 = vmatprep.subr.mxu0 0.0
    %679 = vmatpush1.xpose.msra.mxu0 0.0
    %680 = vmatprep.subr.mxu0 0.0
    %681 = vmatpush1.xpose.msra.mxu0 0.0
    %682 = vmatprep.subr.mxu0 0.0
    %683 = vmatpush1.xpose.msra.mxu0 0.0
    %684 = vmatprep.subr.mxu0 0.0
    %685 = vmatpush1.xpose.msra.mxu0 0.0
    %686 = vmatprep.mubr.f32.mxu0 0.0
    %687 = vmatmul.mubr.f32.gmra.mrb[0].mxu0 %v618
    %v688 = vpop.f32.mrb[0].mxu0
    %v689 = vadd.f32 0.0, %v688
    %v690 = vpop.f32.mrb[0].mxu0
    %691 = vdwg.mxu0
    %v692 = vsel %vm363, %v611, -inf
    %693 = vmax.xlane.f32.xlu0 %v692
    %v694 = vpop.xlane.xlu0 %693
    %v695 = vsel %vm363, %v689, -inf
    %696 = vmax.xlane.f32.xlu0 %v695
    %v697 = vpop.xlane.xlu0 %696
    %v698 = vsub.f32 %v611, %v694
    %v699 = vsub.f32 %v689, %v697
    %v700 = vmul.f32 %v698, 1.442695
    %v701 = vpow.pop %v700
    %v702 = vmul.f32 %v699, 1.442695
    %v703 = vpow.pop %v702
    %v704 = vsel %vm363, %v701, 0.0
    %705 = vadd.xlane.f32.xlu0 %v704
    %v706 = vpop.xlane.xlu0 %705
    %v707 = vsel %vm363, %v703, 0.0
    %708 = vadd.xlane.f32.xlu0 %v707
    %v709 = vpop.xlane.xlu0 %708
    %v710 = vrcp.pop %v706
    %v711 = vrcp.pop %v709
    %v712 = vmul.f32 %v701, %v710
    %v713 = vmul.f32 %v703, %v711
    %715 = vrot.lane.b32.xlu0 %v203, 96
    %v716 = vpop.permute.xlu0 %715
    %v719 = vsel %vm363, %v712, 0
    %721 = vmatprep.subr.mxu0 0.0
    %722 = vmatpush1.msra.mxu0 %v716
    %723 = vmatprep.subr.mxu0 0.0
    %724 = vmatpush1.msra.mxu0 0.0
    %725 = vmatprep.subr.mxu0 0.0
    %726 = vmatpush1.msra.mxu0 0.0
    %727 = vmatprep.subr.mxu0 0.0
    %728 = vmatpush1.msra.mxu0 0.0
    %729 = vmatprep.subr.mxu0 0.0
    %730 = vmatpush1.msra.mxu0 0.0
    %731 = vmatprep.subr.mxu0 0.0
    %732 = vmatpush1.msra.mxu0 0.0
    %733 = vmatprep.subr.mxu0 0.0
    %734 = vmatpush1.msra.mxu0 0.0
    %735 = vmatprep.subr.mxu0 0.0
    %736 = vmatpush1.msra.mxu0 0.0
    %737 = vmatprep.subr.mxu0 0.0
    %738 = vmatpush1.msra.mxu0 0.0
    %739 = vmatprep.subr.mxu0 0.0
    %740 = vmatpush1.msra.mxu0 0.0
    %741 = vmatprep.subr.mxu0 0.0
    %742 = vmatpush1.msra.mxu0 0.0
    %743 = vmatprep.subr.mxu0 0.0
    %744 = vmatpush1.msra.mxu0 0.0
    %745 = vmatprep.subr.mxu0 0.0
    %746 = vmatpush1.msra.mxu0 0.0
    %747 = vmatprep.subr.mxu0 0.0
    %748 = vmatpush1.msra.mxu0 0.0
    %749 = vmatprep.subr.mxu0 0.0
    %750 = vmatpush1.msra.mxu0 0.0
    %751 = vmatprep.subr.mxu0 0.0
    %752 = vmatpush1.msra.mxu0 0.0
    %753 = vmatprep.subr.mxu0 0.0
    %754 = vmatpush1.msra.mxu0 0.0
    %755 = vmatprep.subr.mxu0 0.0
    %756 = vmatpush1.msra.mxu0 0.0
    %757 = vmatprep.subr.mxu0 0.0
    %758 = vmatpush1.msra.mxu0 0.0
    %759 = vmatprep.subr.mxu0 0.0
    %760 = vmatpush1.msra.mxu0 0.0
    %761 = vmatprep.subr.mxu0 0.0
    %762 = vmatpush1.msra.mxu0 0.0
    %763 = vmatprep.subr.mxu0 0.0
    %764 = vmatpush1.msra.mxu0 0.0
    %765 = vmatprep.subr.mxu0 0.0
    %766 = vmatpush1.msra.mxu0 0.0
    %767 = vmatprep.subr.mxu0 0.0
    %768 = vmatpush1.msra.mxu0 0.0
    %769 = vmatprep.subr.mxu0 0.0
    %770 = vmatpush1.msra.mxu0 0.0
    %771 = vmatprep.subr.mxu0 0.0
    %772 = vmatpush1.msra.mxu0 0.0
    %773 = vmatprep.subr.mxu0 0.0
    %774 = vmatpush1.msra.mxu0 0.0
    %775 = vmatprep.subr.mxu0 0.0
    %776 = vmatpush1.msra.mxu0 0.0
    %777 = vmatprep.subr.mxu0 0.0
    %778 = vmatpush1.msra.mxu0 0.0
    %779 = vmatprep.subr.mxu0 0.0
    %780 = vmatpush1.msra.mxu0 0.0
    %781 = vmatprep.subr.mxu0 0.0
    %782 = vmatpush1.msra.mxu0 0.0
    %783 = vmatprep.subr.mxu0 0.0
    %784 = vmatpush1.msra.mxu0 0.0
    %785 = vmatprep.mubr.f32.mxu0 0.0
    %786 = vmatmul.mubr.f32.gmra.mrb[0].mxu0 %v719
    %v787 = vpop.f32.mrb[0].mxu0
    %v788 = vadd.f32 0.0, %v787
    %v789 = vpop.f32.mrb[0].mxu0
    %790 = vdwg.mxu0
    %792 = vrot.lane.b32.xlu0 %v208, 96
    %v793 = vpop.permute.xlu0 %792
    %v796 = vsel %vm363, %v713, 0
    %798 = vmatprep.subr.mxu0 0.0
    %799 = vmatpush1.msra.mxu0 %v793
    %800 = vmatprep.subr.mxu0 0.0
    %801 = vmatpush1.msra.mxu0 0.0
    %802 = vmatprep.subr.mxu0 0.0
    %803 = vmatpush1.msra.mxu0 0.0
    %804 = vmatprep.subr.mxu0 0.0
    %805 = vmatpush1.msra.mxu0 0.0
    %806 = vmatprep.subr.mxu0 0.0
    %807 = vmatpush1.msra.mxu0 0.0
    %808 = vmatprep.subr.mxu0 0.0
    %809 = vmatpush1.msra.mxu0 0.0
    %810 = vmatprep.subr.mxu0 0.0
    %811 = vmatpush1.msra.mxu0 0.0
    %812 = vmatprep.subr.mxu0 0.0
    %813 = vmatpush1.msra.mxu0 0.0
    %814 = vmatprep.subr.mxu0 0.0
    %815 = vmatpush1.msra.mxu0 0.0
    %816 = vmatprep.subr.mxu0 0.0
    %817 = vmatpush1.msra.mxu0 0.0
    %818 = vmatprep.subr.mxu0 0.0
    %819 = vmatpush1.msra.mxu0 0.0
    %820 = vmatprep.subr.mxu0 0.0
    %821 = vmatpush1.msra.mxu0 0.0
    %822 = vmatprep.subr.mxu0 0.0
    %823 = vmatpush1.msra.mxu0 0.0
    %824 = vmatprep.subr.mxu0 0.0
    %825 = vmatpush1.msra.mxu0 0.0
    %826 = vmatprep.subr.mxu0 0.0
    %827 = vmatpush1.msra.mxu0 0.0
    %828 = vmatprep.subr.mxu0 0.0
    %829 = vmatpush1.msra.mxu0 0.0
    %830 = vmatprep.subr.mxu0 0.0
    %831 = vmatpush1.msra.mxu0 0.0
    %832 = vmatprep.subr.mxu0 0.0
    %833 = vmatpush1.msra.mxu0 0.0
    %834 = vmatprep.subr.mxu0 0.0
    %835 = vmatpush1.msra.mxu0 0.0
    %836 = vmatprep.subr.mxu0 0.0
    %837 = vmatpush1.msra.mxu0 0.0
    %838 = vmatprep.subr.mxu0 0.0
    %839 = vmatpush1.msra.mxu0 0.0
    %840 = vmatprep.subr.mxu0 0.0
    %841 = vmatpush1.msra.mxu0 0.0
    %842 = vmatprep.subr.mxu0 0.0
    %843 = vmatpush1.msra.mxu0 0.0
    %844 = vmatprep.subr.mxu0 0.0
    %845 = vmatpush1.msra.mxu0 0.0
    %846 = vmatprep.subr.mxu0 0.0
    %847 = vmatpush1.msra.mxu0 0.0
    %848 = vmatprep.subr.mxu0 0.0
    %849 = vmatpush1.msra.mxu0 0.0
    %850 = vmatprep.subr.mxu0 0.0
    %851 = vmatpush1.msra.mxu0 0.0
    %852 = vmatprep.subr.mxu0 0.0
    %853 = vmatpush1.msra.mxu0 0.0
    %854 = vmatprep.subr.mxu0 0.0
    %855 = vmatpush1.msra.mxu0 0.0
    %856 = vmatprep.subr.mxu0 0.0
    %857 = vmatpush1.msra.mxu0 0.0
    %858 = vmatprep.subr.mxu0 0.0
    %859 = vmatpush1.msra.mxu0 0.0
    %860 = vmatprep.subr.mxu0 0.0
    %861 = vmatpush1.msra.mxu0 0.0
    %862 = vmatprep.mubr.f32.mxu0 0.0
    %863 = vmatmul.mubr.f32.gmra.mrb[0].mxu0 %v796
    %v864 = vpop.f32.mrb[0].mxu0
    %v865 = vadd.f32 0.0, %v864
    %v866 = vpop.f32.mrb[0].mxu0
    %867 = vdwg.mxu0
    %v868 = vld [vmem:[%s3 + $0x20] sm:$0xff]
    %v869 = vld [vmem:[%s3 + $0x28] sm:$0xff]
    %v870 = vld [vmem:[%s3 + $0x30] sm:$0xff]
    %v871 = vld [vmem:[%s3 + $0x38] sm:$0xff]
    %v873 = vsel %vm52, %v788, 0
    %v876 = vsel %vm52, %v865, 0
    %878 = vmatprep.subr.mxu0 0.0
    %879 = vmatpush1.msra.mxu0 %v868
    %880 = vmatprep.subr.mxu0 0.0
    %881 = vmatpush1.msra.mxu0 %v869
    %882 = vmatprep.subr.mxu0 0.0
    %883 = vmatpush1.msra.mxu0 %v870
    %884 = vmatprep.subr.mxu0 0.0
    %885 = vmatpush1.msra.mxu0 %v871
    %886 = vmatprep.subr.mxu0 0.0
    %887 = vmatpush1.msra.mxu0 0.0
    %888 = vmatprep.subr.mxu0 0.0
    %889 = vmatpush1.msra.mxu0 0.0
    %890 = vmatprep.subr.mxu0 0.0
    %891 = vmatpush1.msra.mxu0 0.0
    %892 = vmatprep.subr.mxu0 0.0
    %893 = vmatpush1.msra.mxu0 0.0
    %894 = vmatprep.subr.mxu0 0.0
    %895 = vmatpush1.msra.mxu0 0.0
    %896 = vmatprep.subr.mxu0 0.0
    %897 = vmatpush1.msra.mxu0 0.0
    %898 = vmatprep.subr.mxu0 0.0
    %899 = vmatpush1.msra.mxu0 0.0
    %900 = vmatprep.subr.mxu0 0.0
    %901 = vmatpush1.msra.mxu0 0.0
    %902 = vmatprep.subr.mxu0 0.0
    %903 = vmatpush1.msra.mxu0 0.0
    %904 = vmatprep.subr.mxu0 0.0
    %905 = vmatpush1.msra.mxu0 0.0
    %906 = vmatprep.subr.mxu0 0.0
    %907 = vmatpush1.msra.mxu0 0.0
    %908 = vmatprep.subr.mxu0 0.0
    %909 = vmatpush1.msra.mxu0 0.0
    %910 = vmatprep.subr.mxu0 0.0
    %911 = vmatpush1.msra.mxu0 0.0
    %912 = vmatprep.subr.mxu0 0.0
    %913 = vmatpush1.msra.mxu0 0.0
    %914 = vmatprep.subr.mxu0 0.0
    %915 = vmatpush1.msra.mxu0 0.0
    %916 = vmatprep.subr.mxu0 0.0
    %917 = vmatpush1.msra.mxu0 0.0
    %918 = vmatprep.subr.mxu0 0.0
    %919 = vmatpush1.msra.mxu0 0.0
    %920 = vmatprep.subr.mxu0 0.0
    %921 = vmatpush1.msra.mxu0 0.0
    %922 = vmatprep.subr.mxu0 0.0
    %923 = vmatpush1.msra.mxu0 0.0
    %924 = vmatprep.subr.mxu0 0.0
    %925 = vmatpush1.msra.mxu0 0.0
    %926 = vmatprep.subr.mxu0 0.0
    %927 = vmatpush1.msra.mxu0 0.0
    %928 = vmatprep.subr.mxu0 0.0
    %929 = vmatpush1.msra.mxu0 0.0
    %930 = vmatprep.subr.mxu0 0.0
    %931 = vmatpush1.msra.mxu0 0.0
    %932 = vmatprep.subr.mxu0 0.0
    %933 = vmatpush1.msra.mxu0 0.0
    %934 = vmatprep.subr.mxu0 0.0
    %935 = vmatpush1.msra.mxu0 0.0
    %936 = vmatprep.subr.mxu0 0.0
    %937 = vmatpush1.msra.mxu0 0.0
    %938 = vmatprep.subr.mxu0 0.0
    %939 = vmatpush1.msra.mxu0 0.0
    %940 = vmatprep.subr.mxu0 0.0
    %941 = vmatpush1.msra.mxu0 0.0
    %942 = vmatprep.mubr.f32.mxu0 0.0
    %943 = vmatmul.mubr.f32.gmra.mrb[0].mxu0 %v873
    %v944 = vpop.f32.mrb[0].mxu0
    %v945 = vadd.f32 0.0, %v944
    %v946 = vpop.f32.mrb[0].mxu0
    %947 = vmatprep.mubr.f32.mxu0 0.0
    %948 = vmatmul.mubr.f32.gmra.mrb[0].mxu0 %v876
    %v949 = vpop.f32.mrb[0].mxu0
    %v950 = vadd.f32 0.0, %v949
    %v951 = vpop.f32.mrb[0].mxu0
    %952 = vdwg.mxu0
    %v954 = vsel %vm52, %v456, 0
    %v957 = vsel %vm52, %v529, 0
    %959 = vmatprep.subr.mxu0 0.0
    %960 = vmatpush1.msra.mxu0 %v532
    %961 = vmatprep.subr.mxu0 0.0
    %962 = vmatpush1.msra.mxu0 %v533
    %963 = vmatprep.subr.mxu0 0.0
    %964 = vmatpush1.msra.mxu0 %v534
    %965 = vmatprep.subr.mxu0 0.0
    %966 = vmatpush1.msra.mxu0 %v535
    %967 = vmatprep.subr.mxu0 0.0
    %968 = vmatpush1.msra.mxu0 0.0
    %969 = vmatprep.subr.mxu0 0.0
    %970 = vmatpush1.msra.mxu0 0.0
    %971 = vmatprep.subr.mxu0 0.0
    %972 = vmatpush1.msra.mxu0 0.0
    %973 = vmatprep.subr.mxu0 0.0
    %974 = vmatpush1.msra.mxu0 0.0
    %975 = vmatprep.subr.mxu0 0.0
    %976 = vmatpush1.msra.mxu0 0.0
    %977 = vmatprep.subr.mxu0 0.0
    %978 = vmatpush1.msra.mxu0 0.0
    %979 = vmatprep.subr.mxu0 0.0
    %980 = vmatpush1.msra.mxu0 0.0
    %981 = vmatprep.subr.mxu0 0.0
    %982 = vmatpush1.msra.mxu0 0.0
    %983 = vmatprep.subr.mxu0 0.0
    %984 = vmatpush1.msra.mxu0 0.0
    %985 = vmatprep.subr.mxu0 0.0
    %986 = vmatpush1.msra.mxu0 0.0
    %987 = vmatprep.subr.mxu0 0.0
    %988 = vmatpush1.msra.mxu0 0.0
    %989 = vmatprep.subr.mxu0 0.0
    %990 = vmatpush1.msra.mxu0 0.0
    %991 = vmatprep.subr.mxu0 0.0
    %992 = vmatpush1.msra.mxu0 0.0
    %993 = vmatprep.subr.mxu0 0.0
    %994 = vmatpush1.msra.mxu0 0.0
    %995 = vmatprep.subr.mxu0 0.0
    %996 = vmatpush1.msra.mxu0 0.0
    %997 = vmatprep.subr.mxu0 0.0
    %998 = vmatpush1.msra.mxu0 0.0
    %999 = vmatprep.subr.mxu0 0.0
    %1000 = vmatpush1.msra.mxu0 0.0
    %1001 = vmatprep.subr.mxu0 0.0
    %1002 = vmatpush1.msra.mxu0 0.0
    %1003 = vmatprep.subr.mxu0 0.0
    %1004 = vmatpush1.msra.mxu0 0.0
    %1005 = vmatprep.subr.mxu0 0.0
    %1006 = vmatpush1.msra.mxu0 0.0
    %1007 = vmatprep.subr.mxu0 0.0
    %1008 = vmatpush1.msra.mxu0 0.0
    %1009 = vmatprep.subr.mxu0 0.0
    %1010 = vmatpush1.msra.mxu0 0.0
    %1011 = vmatprep.subr.mxu0 0.0
    %1012 = vmatpush1.msra.mxu0 0.0
    %1013 = vmatprep.subr.mxu0 0.0
    %1014 = vmatpush1.msra.mxu0 0.0
    %1015 = vmatprep.subr.mxu0 0.0
    %1016 = vmatpush1.msra.mxu0 0.0
    %1017 = vmatprep.subr.mxu0 0.0
    %1018 = vmatpush1.msra.mxu0 0.0
    %1019 = vmatprep.subr.mxu0 0.0
    %1020 = vmatpush1.msra.mxu0 0.0
    %1021 = vmatprep.subr.mxu0 0.0
    %1022 = vmatpush1.msra.mxu0 0.0
    %1023 = vmatprep.mubr.f32.mxu0 0.0
    %1024 = vmatmul.mubr.f32.gmra.mrb[0].mxu0 %v954
    %v1025 = vpop.f32.mrb[0].mxu0
    %v1026 = vadd.f32 %v945, %v1025
    %v1027 = vpop.f32.mrb[0].mxu0
    %1028 = vmatprep.mubr.f32.mxu0 0.0
    %1029 = vmatmul.mubr.f32.gmra.mrb[0].mxu0 %v957
    %v1030 = vpop.f32.mrb[0].mxu0
    %v1031 = vadd.f32 %v950, %v1030
    %v1032 = vpop.f32.mrb[0].mxu0
    %1033 = vdwg.mxu0
    %1034 = vrot.lane.b32.xlu0 %v126, 64
    %v1035 = vpop.permute.xlu0 %1034
    %1036 = vrot.lane.b32.xlu0 %v128, 64
    %v1037 = vpop.permute.xlu0 %1036
    %v1038 = vsel %vm52, %v1035, 0
    %v1040 = vsel %vm52, %v1037, 0
    %1042 = vmatprep.subr.mxu0 0.0
    %1043 = vmatpush1.xpose.msra.mxu0 %v1040
    %1044 = vmatprep.subr.mxu0 0.0
    %1045 = vmatpush1.xpose.msra.mxu0 0.0
    %1046 = vmatprep.subr.mxu0 0.0
    %1047 = vmatpush1.xpose.msra.mxu0 0.0
    %1048 = vmatprep.subr.mxu0 0.0
    %1049 = vmatpush1.xpose.msra.mxu0 0.0
    %1050 = vmatprep.subr.mxu0 0.0
    %1051 = vmatpush1.xpose.msra.mxu0 0.0
    %1052 = vmatprep.subr.mxu0 0.0
    %1053 = vmatpush1.xpose.msra.mxu0 0.0
    %1054 = vmatprep.subr.mxu0 0.0
    %1055 = vmatpush1.xpose.msra.mxu0 0.0
    %1056 = vmatprep.subr.mxu0 0.0
    %1057 = vmatpush1.xpose.msra.mxu0 0.0
    %1058 = vmatprep.subr.mxu0 0.0
    %1059 = vmatpush1.xpose.msra.mxu0 0.0
    %1060 = vmatprep.subr.mxu0 0.0
    %1061 = vmatpush1.xpose.msra.mxu0 0.0
    %1062 = vmatprep.subr.mxu0 0.0
    %1063 = vmatpush1.xpose.msra.mxu0 0.0
    %1064 = vmatprep.subr.mxu0 0.0
    %1065 = vmatpush1.xpose.msra.mxu0 0.0
    %1066 = vmatprep.subr.mxu0 0.0
    %1067 = vmatpush1.xpose.msra.mxu0 0.0
    %1068 = vmatprep.subr.mxu0 0.0
    %1069 = vmatpush1.xpose.msra.mxu0 0.0
    %1070 = vmatprep.subr.mxu0 0.0
    %1071 = vmatpush1.xpose.msra.mxu0 0.0
    %1072 = vmatprep.subr.mxu0 0.0
    %1073 = vmatpush1.xpose.msra.mxu0 0.0
    %1074 = vmatprep.subr.mxu0 0.0
    %1075 = vmatpush1.xpose.msra.mxu0 0.0
    %1076 = vmatprep.subr.mxu0 0.0
    %1077 = vmatpush1.xpose.msra.mxu0 0.0
    %1078 = vmatprep.subr.mxu0 0.0
    %1079 = vmatpush1.xpose.msra.mxu0 0.0
    %1080 = vmatprep.subr.mxu0 0.0
    %1081 = vmatpush1.xpose.msra.mxu0 0.0
    %1082 = vmatprep.subr.mxu0 0.0
    %1083 = vmatpush1.xpose.msra.mxu0 0.0
    %1084 = vmatprep.subr.mxu0 0.0
    %1085 = vmatpush1.xpose.msra.mxu0 0.0
    %1086 = vmatprep.subr.mxu0 0.0
    %1087 = vmatpush1.xpose.msra.mxu0 0.0
    %1088 = vmatprep.subr.mxu0 0.0
    %1089 = vmatpush1.xpose.msra.mxu0 0.0
    %1090 = vmatprep.subr.mxu0 0.0
    %1091 = vmatpush1.xpose.msra.mxu0 0.0
    %1092 = vmatprep.subr.mxu0 0.0
    %1093 = vmatpush1.xpose.msra.mxu0 0.0
    %1094 = vmatprep.subr.mxu0 0.0
    %1095 = vmatpush1.xpose.msra.mxu0 0.0
    %1096 = vmatprep.subr.mxu0 0.0
    %1097 = vmatpush1.xpose.msra.mxu0 0.0
    %1098 = vmatprep.subr.mxu0 0.0
    %1099 = vmatpush1.xpose.msra.mxu0 0.0
    %1100 = vmatprep.subr.mxu0 0.0
    %1101 = vmatpush1.xpose.msra.mxu0 0.0
    %1102 = vmatprep.subr.mxu0 0.0
    %1103 = vmatpush1.xpose.msra.mxu0 0.0
    %1104 = vmatprep.subr.mxu0 0.0
    %1105 = vmatpush1.xpose.msra.mxu0 0.0
    %1106 = vmatprep.mubr.f32.mxu0 0.0
    %1107 = vmatmul.mubr.f32.gmra.mrb[0].mxu0 %v1038
    %v1108 = vpop.f32.mrb[0].mxu0
    %v1109 = vadd.f32 0.0, %v1108
    %v1110 = vpop.f32.mrb[0].mxu0
    %1111 = vdwg.mxu0
    %1112 = vrot.lane.b32.xlu0 %v132, 64
    %v1113 = vpop.permute.xlu0 %1112
    %1114 = vrot.lane.b32.xlu0 %v134, 64
    %v1115 = vpop.permute.xlu0 %1114
    %v1116 = vsel %vm52, %v1113, 0
    %v1118 = vsel %vm52, %v1115, 0
    %1120 = vmatprep.subr.mxu0 0.0
    %1121 = vmatpush1.xpose.msra.mxu0 %v1118
    %1122 = vmatprep.subr.mxu0 0.0
    %1123 = vmatpush1.xpose.msra.mxu0 0.0
    %1124 = vmatprep.subr.mxu0 0.0
    %1125 = vmatpush1.xpose.msra.mxu0 0.0
    %1126 = vmatprep.subr.mxu0 0.0
    %1127 = vmatpush1.xpose.msra.mxu0 0.0
    %1128 = vmatprep.subr.mxu0 0.0
    %1129 = vmatpush1.xpose.msra.mxu0 0.0
    %1130 = vmatprep.subr.mxu0 0.0
    %1131 = vmatpush1.xpose.msra.mxu0 0.0
    %1132 = vmatprep.subr.mxu0 0.0
    %1133 = vmatpush1.xpose.msra.mxu0 0.0
    %1134 = vmatprep.subr.mxu0 0.0
    %1135 = vmatpush1.xpose.msra.mxu0 0.0
    %1136 = vmatprep.subr.mxu0 0.0
    %1137 = vmatpush1.xpose.msra.mxu0 0.0
    %1138 = vmatprep.subr.mxu0 0.0
    %1139 = vmatpush1.xpose.msra.mxu0 0.0
    %1140 = vmatprep.subr.mxu0 0.0
    %1141 = vmatpush1.xpose.msra.mxu0 0.0
    %1142 = vmatprep.subr.mxu0 0.0
    %1143 = vmatpush1.xpose.msra.mxu0 0.0
    %1144 = vmatprep.subr.mxu0 0.0
    %1145 = vmatpush1.xpose.msra.mxu0 0.0
    %1146 = vmatprep.subr.mxu0 0.0
    %1147 = vmatpush1.xpose.msra.mxu0 0.0
    %1148 = vmatprep.subr.mxu0 0.0
    %1149 = vmatpush1.xpose.msra.mxu0 0.0
    %1150 = vmatprep.subr.mxu0 0.0
    %1151 = vmatpush1.xpose.msra.mxu0 0.0
    %1152 = vmatprep.subr.mxu0 0.0
    %1153 = vmatpush1.xpose.msra.mxu0 0.0
    %1154 = vmatprep.subr.mxu0 0.0
    %1155 = vmatpush1.xpose.msra.mxu0 0.0
    %1156 = vmatprep.subr.mxu0 0.0
    %1157 = vmatpush1.xpose.msra.mxu0 0.0
    %1158 = vmatprep.subr.mxu0 0.0
    %1159 = vmatpush1.xpose.msra.mxu0 0.0
    %1160 = vmatprep.subr.mxu0 0.0
    %1161 = vmatpush1.xpose.msra.mxu0 0.0
    %1162 = vmatprep.subr.mxu0 0.0
    %1163 = vmatpush1.xpose.msra.mxu0 0.0
    %1164 = vmatprep.subr.mxu0 0.0
    %1165 = vmatpush1.xpose.msra.mxu0 0.0
    %1166 = vmatprep.subr.mxu0 0.0
    %1167 = vmatpush1.xpose.msra.mxu0 0.0
    %1168 = vmatprep.subr.mxu0 0.0
    %1169 = vmatpush1.xpose.msra.mxu0 0.0
    %1170 = vmatprep.subr.mxu0 0.0
    %1171 = vmatpush1.xpose.msra.mxu0 0.0
    %1172 = vmatprep.subr.mxu0 0.0
    %1173 = vmatpush1.xpose.msra.mxu0 0.0
    %1174 = vmatprep.subr.mxu0 0.0
    %1175 = vmatpush1.xpose.msra.mxu0 0.0
    %1176 = vmatprep.subr.mxu0 0.0
    %1177 = vmatpush1.xpose.msra.mxu0 0.0
    %1178 = vmatprep.subr.mxu0 0.0
    %1179 = vmatpush1.xpose.msra.mxu0 0.0
    %1180 = vmatprep.subr.mxu0 0.0
    %1181 = vmatpush1.xpose.msra.mxu0 0.0
    %1182 = vmatprep.subr.mxu0 0.0
    %1183 = vmatpush1.xpose.msra.mxu0 0.0
    %1184 = vmatprep.mubr.f32.mxu0 0.0
    %1185 = vmatmul.mubr.f32.gmra.mrb[0].mxu0 %v1116
    %v1186 = vpop.f32.mrb[0].mxu0
    %v1187 = vadd.f32 0.0, %v1186
    %v1188 = vpop.f32.mrb[0].mxu0
    %1189 = vdwg.mxu0
    %v1190 = vsel %vm363, %v1109, -inf
    %1191 = vmax.xlane.f32.xlu0 %v1190
    %v1192 = vpop.xlane.xlu0 %1191
    %v1193 = vsel %vm363, %v1187, -inf
    %1194 = vmax.xlane.f32.xlu0 %v1193
    %v1195 = vpop.xlane.xlu0 %1194
    %v1196 = vsub.f32 %v1109, %v1192
    %v1197 = vsub.f32 %v1187, %v1195
    %v1198 = vmul.f32 %v1196, 1.442695
    %v1199 = vpow.pop %v1198
    %v1200 = vmul.f32 %v1197, 1.442695
    %v1201 = vpow.pop %v1200
    %v1202 = vsel %vm363, %v1199, 0.0
    %1203 = vadd.xlane.f32.xlu0 %v1202
    %v1204 = vpop.xlane.xlu0 %1203
    %v1205 = vsel %vm363, %v1201, 0.0
    %1206 = vadd.xlane.f32.xlu0 %v1205
    %v1207 = vpop.xlane.xlu0 %1206
    %v1208 = vrcp.pop %v1204
    %v1209 = vrcp.pop %v1207
    %v1210 = vmul.f32 %v1199, %v1208
    %v1211 = vmul.f32 %v1201, %v1209
    %1212 = vrot.lane.b32.xlu0 %v203, 64
    %v1213 = vpop.permute.xlu0 %1212
    %v1216 = vsel %vm363, %v1210, 0
    %1218 = vmatprep.subr.mxu0 0.0
    %1219 = vmatpush1.msra.mxu0 %v1213
    %1220 = vmatprep.subr.mxu0 0.0
    %1221 = vmatpush1.msra.mxu0 0.0
    %1222 = vmatprep.subr.mxu0 0.0
    %1223 = vmatpush1.msra.mxu0 0.0
    %1224 = vmatprep.subr.mxu0 0.0
    %1225 = vmatpush1.msra.mxu0 0.0
    %1226 = vmatprep.subr.mxu0 0.0
    %1227 = vmatpush1.msra.mxu0 0.0
    %1228 = vmatprep.subr.mxu0 0.0
    %1229 = vmatpush1.msra.mxu0 0.0
    %1230 = vmatprep.subr.mxu0 0.0
    %1231 = vmatpush1.msra.mxu0 0.0
    %1232 = vmatprep.subr.mxu0 0.0
    %1233 = vmatpush1.msra.mxu0 0.0
    %1234 = vmatprep.subr.mxu0 0.0
    %1235 = vmatpush1.msra.mxu0 0.0
    %1236 = vmatprep.subr.mxu0 0.0
    %1237 = vmatpush1.msra.mxu0 0.0
    %1238 = vmatprep.subr.mxu0 0.0
    %1239 = vmatpush1.msra.mxu0 0.0
    %1240 = vmatprep.subr.mxu0 0.0
    %1241 = vmatpush1.msra.mxu0 0.0
    %1242 = vmatprep.subr.mxu0 0.0
    %1243 = vmatpush1.msra.mxu0 0.0
    %1244 = vmatprep.subr.mxu0 0.0
    %1245 = vmatpush1.msra.mxu0 0.0
    %1246 = vmatprep.subr.mxu0 0.0
    %1247 = vmatpush1.msra.mxu0 0.0
    %1248 = vmatprep.subr.mxu0 0.0
    %1249 = vmatpush1.msra.mxu0 0.0
    %1250 = vmatprep.subr.mxu0 0.0
    %1251 = vmatpush1.msra.mxu0 0.0
    %1252 = vmatprep.subr.mxu0 0.0
    %1253 = vmatpush1.msra.mxu0 0.0
    %1254 = vmatprep.subr.mxu0 0.0
    %1255 = vmatpush1.msra.mxu0 0.0
    %1256 = vmatprep.subr.mxu0 0.0
    %1257 = vmatpush1.msra.mxu0 0.0
    %1258 = vmatprep.subr.mxu0 0.0
    %1259 = vmatpush1.msra.mxu0 0.0
    %1260 = vmatprep.subr.mxu0 0.0
    %1261 = vmatpush1.msra.mxu0 0.0
    %1262 = vmatprep.subr.mxu0 0.0
    %1263 = vmatpush1.msra.mxu0 0.0
    %1264 = vmatprep.subr.mxu0 0.0
    %1265 = vmatpush1.msra.mxu0 0.0
    %1266 = vmatprep.subr.mxu0 0.0
    %1267 = vmatpush1.msra.mxu0 0.0
    %1268 = vmatprep.subr.mxu0 0.0
    %1269 = vmatpush1.msra.mxu0 0.0
    %1270 = vmatprep.subr.mxu0 0.0
    %1271 = vmatpush1.msra.mxu0 0.0
    %1272 = vmatprep.subr.mxu0 0.0
    %1273 = vmatpush1.msra.mxu0 0.0
    %1274 = vmatprep.subr.mxu0 0.0
    %1275 = vmatpush1.msra.mxu0 0.0
    %1276 = vmatprep.subr.mxu0 0.0
    %1277 = vmatpush1.msra.mxu0 0.0
    %1278 = vmatprep.subr.mxu0 0.0
    %1279 = vmatpush1.msra.mxu0 0.0
    %1280 = vmatprep.subr.mxu0 0.0
    %1281 = vmatpush1.msra.mxu0 0.0
    %1282 = vmatprep.mubr.f32.mxu0 0.0
    %1283 = vmatmul.mubr.f32.gmra.mrb[0].mxu0 %v1216
    %v1284 = vpop.f32.mrb[0].mxu0
    %v1285 = vadd.f32 0.0, %v1284
    %v1286 = vpop.f32.mrb[0].mxu0
    %1287 = vdwg.mxu0
    %1288 = vrot.lane.b32.xlu0 %v208, 64
    %v1289 = vpop.permute.xlu0 %1288
    %v1292 = vsel %vm363, %v1211, 0
    %1294 = vmatprep.subr.mxu0 0.0
    %1295 = vmatpush1.msra.mxu0 %v1289
    %1296 = vmatprep.subr.mxu0 0.0
    %1297 = vmatpush1.msra.mxu0 0.0
    %1298 = vmatprep.subr.mxu0 0.0
    %1299 = vmatpush1.msra.mxu0 0.0
    %1300 = vmatprep.subr.mxu0 0.0
    %1301 = vmatpush1.msra.mxu0 0.0
    %1302 = vmatprep.subr.mxu0 0.0
    %1303 = vmatpush1.msra.mxu0 0.0
    %1304 = vmatprep.subr.mxu0 0.0
    %1305 = vmatpush1.msra.mxu0 0.0
    %1306 = vmatprep.subr.mxu0 0.0
    %1307 = vmatpush1.msra.mxu0 0.0
    %1308 = vmatprep.subr.mxu0 0.0
    %1309 = vmatpush1.msra.mxu0 0.0
    %1310 = vmatprep.subr.mxu0 0.0
    %1311 = vmatpush1.msra.mxu0 0.0
    %1312 = vmatprep.subr.mxu0 0.0
    %1313 = vmatpush1.msra.mxu0 0.0
    %1314 = vmatprep.subr.mxu0 0.0
    %1315 = vmatpush1.msra.mxu0 0.0
    %1316 = vmatprep.subr.mxu0 0.0
    %1317 = vmatpush1.msra.mxu0 0.0
    %1318 = vmatprep.subr.mxu0 0.0
    %1319 = vmatpush1.msra.mxu0 0.0
    %1320 = vmatprep.subr.mxu0 0.0
    %1321 = vmatpush1.msra.mxu0 0.0
    %1322 = vmatprep.subr.mxu0 0.0
    %1323 = vmatpush1.msra.mxu0 0.0
    %1324 = vmatprep.subr.mxu0 0.0
    %1325 = vmatpush1.msra.mxu0 0.0
    %1326 = vmatprep.subr.mxu0 0.0
    %1327 = vmatpush1.msra.mxu0 0.0
    %1328 = vmatprep.subr.mxu0 0.0
    %1329 = vmatpush1.msra.mxu0 0.0
    %1330 = vmatprep.subr.mxu0 0.0
    %1331 = vmatpush1.msra.mxu0 0.0
    %1332 = vmatprep.subr.mxu0 0.0
    %1333 = vmatpush1.msra.mxu0 0.0
    %1334 = vmatprep.subr.mxu0 0.0
    %1335 = vmatpush1.msra.mxu0 0.0
    %1336 = vmatprep.subr.mxu0 0.0
    %1337 = vmatpush1.msra.mxu0 0.0
    %1338 = vmatprep.subr.mxu0 0.0
    %1339 = vmatpush1.msra.mxu0 0.0
    %1340 = vmatprep.subr.mxu0 0.0
    %1341 = vmatpush1.msra.mxu0 0.0
    %1342 = vmatprep.subr.mxu0 0.0
    %1343 = vmatpush1.msra.mxu0 0.0
    %1344 = vmatprep.subr.mxu0 0.0
    %1345 = vmatpush1.msra.mxu0 0.0
    %1346 = vmatprep.subr.mxu0 0.0
    %1347 = vmatpush1.msra.mxu0 0.0
    %1348 = vmatprep.subr.mxu0 0.0
    %1349 = vmatpush1.msra.mxu0 0.0
    %1350 = vmatprep.subr.mxu0 0.0
    %1351 = vmatpush1.msra.mxu0 0.0
    %1352 = vmatprep.subr.mxu0 0.0
    %1353 = vmatpush1.msra.mxu0 0.0
    %1354 = vmatprep.subr.mxu0 0.0
    %1355 = vmatpush1.msra.mxu0 0.0
    %1356 = vmatprep.subr.mxu0 0.0
    %1357 = vmatpush1.msra.mxu0 0.0
    %1358 = vmatprep.mubr.f32.mxu0 0.0
    %1359 = vmatmul.mubr.f32.gmra.mrb[0].mxu0 %v1292
    %v1360 = vpop.f32.mrb[0].mxu0
    %v1361 = vadd.f32 0.0, %v1360
    %v1362 = vpop.f32.mrb[0].mxu0
    %1363 = vdwg.mxu0
    %v1364 = vld [vmem:[%s3 + $0x40] sm:$0xff]
    %v1365 = vld [vmem:[%s3 + $0x48] sm:$0xff]
    %v1366 = vld [vmem:[%s3 + $0x50] sm:$0xff]
    %v1367 = vld [vmem:[%s3 + $0x58] sm:$0xff]
    %v1369 = vsel %vm52, %v1285, 0
    %v1372 = vsel %vm52, %v1361, 0
    %1374 = vmatprep.subr.mxu0 0.0
    %1375 = vmatpush1.msra.mxu0 %v1364
    %1376 = vmatprep.subr.mxu0 0.0
    %1377 = vmatpush1.msra.mxu0 %v1365
    %1378 = vmatprep.subr.mxu0 0.0
    %1379 = vmatpush1.msra.mxu0 %v1366
    %1380 = vmatprep.subr.mxu0 0.0
    %1381 = vmatpush1.msra.mxu0 %v1367
    %1382 = vmatprep.subr.mxu0 0.0
    %1383 = vmatpush1.msra.mxu0 0.0
    %1384 = vmatprep.subr.mxu0 0.0
    %1385 = vmatpush1.msra.mxu0 0.0
    %1386 = vmatprep.subr.mxu0 0.0
    %1387 = vmatpush1.msra.mxu0 0.0
    %1388 = vmatprep.subr.mxu0 0.0
    %1389 = vmatpush1.msra.mxu0 0.0
    %1390 = vmatprep.subr.mxu0 0.0
    %1391 = vmatpush1.msra.mxu0 0.0
    %1392 = vmatprep.subr.mxu0 0.0
    %1393 = vmatpush1.msra.mxu0 0.0
    %1394 = vmatprep.subr.mxu0 0.0
    %1395 = vmatpush1.msra.mxu0 0.0
    %1396 = vmatprep.subr.mxu0 0.0
    %1397 = vmatpush1.msra.mxu0 0.0
    %1398 = vmatprep.subr.mxu0 0.0
    %1399 = vmatpush1.msra.mxu0 0.0
    %1400 = vmatprep.subr.mxu0 0.0
    %1401 = vmatpush1.msra.mxu0 0.0
    %1402 = vmatprep.subr.mxu0 0.0
    %1403 = vmatpush1.msra.mxu0 0.0
    %1404 = vmatprep.subr.mxu0 0.0
    %1405 = vmatpush1.msra.mxu0 0.0
    %1406 = vmatprep.subr.mxu0 0.0
    %1407 = vmatpush1.msra.mxu0 0.0
    %1408 = vmatprep.subr.mxu0 0.0
    %1409 = vmatpush1.msra.mxu0 0.0
    %1410 = vmatprep.subr.mxu0 0.0
    %1411 = vmatpush1.msra.mxu0 0.0
    %1412 = vmatprep.subr.mxu0 0.0
    %1413 = vmatpush1.msra.mxu0 0.0
    %1414 = vmatprep.subr.mxu0 0.0
    %1415 = vmatpush1.msra.mxu0 0.0
    %1416 = vmatprep.subr.mxu0 0.0
    %1417 = vmatpush1.msra.mxu0 0.0
    %1418 = vmatprep.subr.mxu0 0.0
    %1419 = vmatpush1.msra.mxu0 0.0
    %1420 = vmatprep.subr.mxu0 0.0
    %1421 = vmatpush1.msra.mxu0 0.0
    %1422 = vmatprep.subr.mxu0 0.0
    %1423 = vmatpush1.msra.mxu0 0.0
    %1424 = vmatprep.subr.mxu0 0.0
    %1425 = vmatpush1.msra.mxu0 0.0
    %1426 = vmatprep.subr.mxu0 0.0
    %1427 = vmatpush1.msra.mxu0 0.0
    %1428 = vmatprep.subr.mxu0 0.0
    %1429 = vmatpush1.msra.mxu0 0.0
    %1430 = vmatprep.subr.mxu0 0.0
    %1431 = vmatpush1.msra.mxu0 0.0
    %1432 = vmatprep.subr.mxu0 0.0
    %1433 = vmatpush1.msra.mxu0 0.0
    %1434 = vmatprep.subr.mxu0 0.0
    %1435 = vmatpush1.msra.mxu0 0.0
    %1436 = vmatprep.subr.mxu0 0.0
    %1437 = vmatpush1.msra.mxu0 0.0
    %1438 = vmatprep.mubr.f32.mxu0 0.0
    %1439 = vmatmul.mubr.f32.gmra.mrb[0].mxu0 %v1369
    %v1440 = vpop.f32.mrb[0].mxu0
    %v1441 = vadd.f32 0.0, %v1440
    %v1442 = vpop.f32.mrb[0].mxu0
    %1443 = vmatprep.mubr.f32.mxu0 0.0
    %1444 = vmatmul.mubr.f32.gmra.mrb[0].mxu0 %v1372
    %v1445 = vpop.f32.mrb[0].mxu0
    %v1446 = vadd.f32 0.0, %v1445
    %v1447 = vpop.f32.mrb[0].mxu0
    %1448 = vdwg.mxu0
    %v1449 = vadd.f32 %v1026, %v1441
    %v1450 = vadd.f32 %v1031, %v1446
    %1451 = vrot.lane.b32.xlu0 %v126, 32
    %v1452 = vpop.permute.xlu0 %1451
    %1453 = vrot.lane.b32.xlu0 %v128, 32
    %v1454 = vpop.permute.xlu0 %1453
    %v1455 = vsel %vm52, %v1452, 0
    %v1457 = vsel %vm52, %v1454, 0
    %1459 = vmatprep.subr.mxu0 0.0
    %1460 = vmatpush1.xpose.msra.mxu0 %v1457
    %1461 = vmatprep.subr.mxu0 0.0
    %1462 = vmatpush1.xpose.msra.mxu0 0.0
    %1463 = vmatprep.subr.mxu0 0.0
    %1464 = vmatpush1.xpose.msra.mxu0 0.0
    %1465 = vmatprep.subr.mxu0 0.0
    %1466 = vmatpush1.xpose.msra.mxu0 0.0
    %1467 = vmatprep.subr.mxu0 0.0
    %1468 = vmatpush1.xpose.msra.mxu0 0.0
    %1469 = vmatprep.subr.mxu0 0.0
    %1470 = vmatpush1.xpose.msra.mxu0 0.0
    %1471 = vmatprep.subr.mxu0 0.0
    %1472 = vmatpush1.xpose.msra.mxu0 0.0
    %1473 = vmatprep.subr.mxu0 0.0
    %1474 = vmatpush1.xpose.msra.mxu0 0.0
    %1475 = vmatprep.subr.mxu0 0.0
    %1476 = vmatpush1.xpose.msra.mxu0 0.0
    %1477 = vmatprep.subr.mxu0 0.0
    %1478 = vmatpush1.xpose.msra.mxu0 0.0
    %1479 = vmatprep.subr.mxu0 0.0
    %1480 = vmatpush1.xpose.msra.mxu0 0.0
    %1481 = vmatprep.subr.mxu0 0.0
    %1482 = vmatpush1.xpose.msra.mxu0 0.0
    %1483 = vmatprep.subr.mxu0 0.0
    %1484 = vmatpush1.xpose.msra.mxu0 0.0
    %1485 = vmatprep.subr.mxu0 0.0
    %1486 = vmatpush1.xpose.msra.mxu0 0.0
    %1487 = vmatprep.subr.mxu0 0.0
    %1488 = vmatpush1.xpose.msra.mxu0 0.0
    %1489 = vmatprep.subr.mxu0 0.0
    %1490 = vmatpush1.xpose.msra.mxu0 0.0
    %1491 = vmatprep.subr.mxu0 0.0
    %1492 = vmatpush1.xpose.msra.mxu0 0.0
    %1493 = vmatprep.subr.mxu0 0.0
    %1494 = vmatpush1.xpose.msra.mxu0 0.0
    %1495 = vmatprep.subr.mxu0 0.0
    %1496 = vmatpush1.xpose.msra.mxu0 0.0
    %1497 = vmatprep.subr.mxu0 0.0
    %1498 = vmatpush1.xpose.msra.mxu0 0.0
    %1499 = vmatprep.subr.mxu0 0.0
    %1500 = vmatpush1.xpose.msra.mxu0 0.0
    %1501 = vmatprep.subr.mxu0 0.0
    %1502 = vmatpush1.xpose.msra.mxu0 0.0
    %1503 = vmatprep.subr.mxu0 0.0
    %1504 = vmatpush1.xpose.msra.mxu0 0.0
    %1505 = vmatprep.subr.mxu0 0.0
    %1506 = vmatpush1.xpose.msra.mxu0 0.0
    %1507 = vmatprep.subr.mxu0 0.0
    %1508 = vmatpush1.xpose.msra.mxu0 0.0
    %1509 = vmatprep.subr.mxu0 0.0
    %1510 = vmatpush1.xpose.msra.mxu0 0.0
    %1511 = vmatprep.subr.mxu0 0.0
    %1512 = vmatpush1.xpose.msra.mxu0 0.0
    %1513 = vmatprep.subr.mxu0 0.0
    %1514 = vmatpush1.xpose.msra.mxu0 0.0
    %1515 = vmatprep.subr.mxu0 0.0
    %1516 = vmatpush1.xpose.msra.mxu0 0.0
    %1517 = vmatprep.subr.mxu0 0.0
    %1518 = vmatpush1.xpose.msra.mxu0 0.0
    %1519 = vmatprep.subr.mxu0 0.0
    %1520 = vmatpush1.xpose.msra.mxu0 0.0
    %1521 = vmatprep.subr.mxu0 0.0
    %1522 = vmatpush1.xpose.msra.mxu0 0.0
    %1523 = vmatprep.mubr.f32.mxu0 0.0
    %1524 = vmatmul.mubr.f32.gmra.mrb[0].mxu0 %v1455
    %v1525 = vpop.f32.mrb[0].mxu0
    %v1526 = vadd.f32 0.0, %v1525
    %v1527 = vpop.f32.mrb[0].mxu0
    %1528 = vdwg.mxu0
    %1529 = vrot.lane.b32.xlu0 %v132, 32
    %v1530 = vpop.permute.xlu0 %1529
    %1531 = vrot.lane.b32.xlu0 %v134, 32
    %v1532 = vpop.permute.xlu0 %1531
    %v1533 = vsel %vm52, %v1530, 0
    %v1535 = vsel %vm52, %v1532, 0
    %1537 = vmatprep.subr.mxu0 0.0
    %1538 = vmatpush1.xpose.msra.mxu0 %v1535
    %1539 = vmatprep.subr.mxu0 0.0
    %1540 = vmatpush1.xpose.msra.mxu0 0.0
    %1541 = vmatprep.subr.mxu0 0.0
    %1542 = vmatpush1.xpose.msra.mxu0 0.0
    %1543 = vmatprep.subr.mxu0 0.0
    %1544 = vmatpush1.xpose.msra.mxu0 0.0
    %1545 = vmatprep.subr.mxu0 0.0
    %1546 = vmatpush1.xpose.msra.mxu0 0.0
    %1547 = vmatprep.subr.mxu0 0.0
    %1548 = vmatpush1.xpose.msra.mxu0 0.0
    %1549 = vmatprep.subr.mxu0 0.0
    %1550 = vmatpush1.xpose.msra.mxu0 0.0
    %1551 = vmatprep.subr.mxu0 0.0
    %1552 = vmatpush1.xpose.msra.mxu0 0.0
    %1553 = vmatprep.subr.mxu0 0.0
    %1554 = vmatpush1.xpose.msra.mxu0 0.0
    %1555 = vmatprep.subr.mxu0 0.0
    %1556 = vmatpush1.xpose.msra.mxu0 0.0
    %1557 = vmatprep.subr.mxu0 0.0
    %1558 = vmatpush1.xpose.msra.mxu0 0.0
    %1559 = vmatprep.subr.mxu0 0.0
    %1560 = vmatpush1.xpose.msra.mxu0 0.0
    %1561 = vmatprep.subr.mxu0 0.0
    %1562 = vmatpush1.xpose.msra.mxu0 0.0
    %1563 = vmatprep.subr.mxu0 0.0
    %1564 = vmatpush1.xpose.msra.mxu0 0.0
    %1565 = vmatprep.subr.mxu0 0.0
    %1566 = vmatpush1.xpose.msra.mxu0 0.0
    %1567 = vmatprep.subr.mxu0 0.0
    %1568 = vmatpush1.xpose.msra.mxu0 0.0
    %1569 = vmatprep.subr.mxu0 0.0
    %1570 = vmatpush1.xpose.msra.mxu0 0.0
    %1571 = vmatprep.subr.mxu0 0.0
    %1572 = vmatpush1.xpose.msra.mxu0 0.0
    %1573 = vmatprep.subr.mxu0 0.0
    %1574 = vmatpush1.xpose.msra.mxu0 0.0
    %1575 = vmatprep.subr.mxu0 0.0
    %1576 = vmatpush1.xpose.msra.mxu0 0.0
    %1577 = vmatprep.subr.mxu0 0.0
    %1578 = vmatpush1.xpose.msra.mxu0 0.0
    %1579 = vmatprep.subr.mxu0 0.0
    %1580 = vmatpush1.xpose.msra.mxu0 0.0
    %1581 = vmatprep.subr.mxu0 0.0
    %1582 = vmatpush1.xpose.msra.mxu0 0.0
    %1583 = vmatprep.subr.mxu0 0.0
    %1584 = vmatpush1.xpose.msra.mxu0 0.0
    %1585 = vmatprep.subr.mxu0 0.0
    %1586 = vmatpush1.xpose.msra.mxu0 0.0
    %1587 = vmatprep.subr.mxu0 0.0
    %1588 = vmatpush1.xpose.msra.mxu0 0.0
    %1589 = vmatprep.subr.mxu0 0.0
    %1590 = vmatpush1.xpose.msra.mxu0 0.0
    %1591 = vmatprep.subr.mxu0 0.0
    %1592 = vmatpush1.xpose.msra.mxu0 0.0
    %1593 = vmatprep.subr.mxu0 0.0
    %1594 = vmatpush1.xpose.msra.mxu0 0.0
    %1595 = vmatprep.subr.mxu0 0.0
    %1596 = vmatpush1.xpose.msra.mxu0 0.0
    %1597 = vmatprep.subr.mxu0 0.0
    %1598 = vmatpush1.xpose.msra.mxu0 0.0
    %1599 = vmatprep.subr.mxu0 0.0
    %1600 = vmatpush1.xpose.msra.mxu0 0.0
    %1601 = vmatprep.mubr.f32.mxu0 0.0
    %1602 = vmatmul.mubr.f32.gmra.mrb[0].mxu0 %v1533
    %v1603 = vpop.f32.mrb[0].mxu0
    %v1604 = vadd.f32 0.0, %v1603
    %v1605 = vpop.f32.mrb[0].mxu0
    %1606 = vdwg.mxu0
    %v1607 = vsel %vm363, %v1526, -inf
    %1608 = vmax.xlane.f32.xlu0 %v1607
    %v1609 = vpop.xlane.xlu0 %1608
    %v1610 = vsel %vm363, %v1604, -inf
    %1611 = vmax.xlane.f32.xlu0 %v1610
    %v1612 = vpop.xlane.xlu0 %1611
    %v1613 = vsub.f32 %v1526, %v1609
    %v1614 = vsub.f32 %v1604, %v1612
    %v1615 = vmul.f32 %v1613, 1.442695
    %v1616 = vpow.pop %v1615
    %v1617 = vmul.f32 %v1614, 1.442695
    %v1618 = vpow.pop %v1617
    %v1619 = vsel %vm363, %v1616, 0.0
    %1620 = vadd.xlane.f32.xlu0 %v1619
    %v1621 = vpop.xlane.xlu0 %1620
    %v1622 = vsel %vm363, %v1618, 0.0
    %1623 = vadd.xlane.f32.xlu0 %v1622
    %v1624 = vpop.xlane.xlu0 %1623
    %v1625 = vrcp.pop %v1621
    %v1626 = vrcp.pop %v1624
    %v1627 = vmul.f32 %v1616, %v1625
    %v1628 = vmul.f32 %v1618, %v1626
    %1629 = vrot.lane.b32.xlu0 %v203, 32
    %v1630 = vpop.permute.xlu0 %1629
    %v1633 = vsel %vm363, %v1627, 0
    %1635 = vmatprep.subr.mxu0 0.0
    %1636 = vmatpush1.msra.mxu0 %v1630
    %1637 = vmatprep.subr.mxu0 0.0
    %1638 = vmatpush1.msra.mxu0 0.0
    %1639 = vmatprep.subr.mxu0 0.0
    %1640 = vmatpush1.msra.mxu0 0.0
    %1641 = vmatprep.subr.mxu0 0.0
    %1642 = vmatpush1.msra.mxu0 0.0
    %1643 = vmatprep.subr.mxu0 0.0
    %1644 = vmatpush1.msra.mxu0 0.0
    %1645 = vmatprep.subr.mxu0 0.0
    %1646 = vmatpush1.msra.mxu0 0.0
    %1647 = vmatprep.subr.mxu0 0.0
    %1648 = vmatpush1.msra.mxu0 0.0
    %1649 = vmatprep.subr.mxu0 0.0
    %1650 = vmatpush1.msra.mxu0 0.0
    %1651 = vmatprep.subr.mxu0 0.0
    %1652 = vmatpush1.msra.mxu0 0.0
    %1653 = vmatprep.subr.mxu0 0.0
    %1654 = vmatpush1.msra.mxu0 0.0
    %1655 = vmatprep.subr.mxu0 0.0
    %1656 = vmatpush1.msra.mxu0 0.0
    %1657 = vmatprep.subr.mxu0 0.0
    %1658 = vmatpush1.msra.mxu0 0.0
    %1659 = vmatprep.subr.mxu0 0.0
    %1660 = vmatpush1.msra.mxu0 0.0
    %1661 = vmatprep.subr.mxu0 0.0
    %1662 = vmatpush1.msra.mxu0 0.0
    %1663 = vmatprep.subr.mxu0 0.0
    %1664 = vmatpush1.msra.mxu0 0.0
    %1665 = vmatprep.subr.mxu0 0.0
    %1666 = vmatpush1.msra.mxu0 0.0
    %1667 = vmatprep.subr.mxu0 0.0
    %1668 = vmatpush1.msra.mxu0 0.0
    %1669 = vmatprep.subr.mxu0 0.0
    %1670 = vmatpush1.msra.mxu0 0.0
    %1671 = vmatprep.subr.mxu0 0.0
    %1672 = vmatpush1.msra.mxu0 0.0
    %1673 = vmatprep.subr.mxu0 0.0
    %1674 = vmatpush1.msra.mxu0 0.0
    %1675 = vmatprep.subr.mxu0 0.0
    %1676 = vmatpush1.msra.mxu0 0.0
    %1677 = vmatprep.subr.mxu0 0.0
    %1678 = vmatpush1.msra.mxu0 0.0
    %1679 = vmatprep.subr.mxu0 0.0
    %1680 = vmatpush1.msra.mxu0 0.0
    %1681 = vmatprep.subr.mxu0 0.0
    %1682 = vmatpush1.msra.mxu0 0.0
    %1683 = vmatprep.subr.mxu0 0.0
    %1684 = vmatpush1.msra.mxu0 0.0
    %1685 = vmatprep.subr.mxu0 0.0
    %1686 = vmatpush1.msra.mxu0 0.0
    %1687 = vmatprep.subr.mxu0 0.0
    %1688 = vmatpush1.msra.mxu0 0.0
    %1689 = vmatprep.subr.mxu0 0.0
    %1690 = vmatpush1.msra.mxu0 0.0
    %1691 = vmatprep.subr.mxu0 0.0
    %1692 = vmatpush1.msra.mxu0 0.0
    %1693 = vmatprep.subr.mxu0 0.0
    %1694 = vmatpush1.msra.mxu0 0.0
    %1695 = vmatprep.subr.mxu0 0.0
    %1696 = vmatpush1.msra.mxu0 0.0
    %1697 = vmatprep.subr.mxu0 0.0
    %1698 = vmatpush1.msra.mxu0 0.0
    %1699 = vmatprep.mubr.f32.mxu0 0.0
    %1700 = vmatmul.mubr.f32.gmra.mrb[0].mxu0 %v1633
    %v1701 = vpop.f32.mrb[0].mxu0
    %v1702 = vadd.f32 0.0, %v1701
    %v1703 = vpop.f32.mrb[0].mxu0
    %1704 = vdwg.mxu0
    %1705 = vrot.lane.b32.xlu0 %v208, 32
    %v1706 = vpop.permute.xlu0 %1705
    %v1709 = vsel %vm363, %v1628, 0
    %1711 = vmatprep.subr.mxu0 0.0
    %1712 = vmatpush1.msra.mxu0 %v1706
    %1713 = vmatprep.subr.mxu0 0.0
    %1714 = vmatpush1.msra.mxu0 0.0
    %1715 = vmatprep.subr.mxu0 0.0
    %1716 = vmatpush1.msra.mxu0 0.0
    %1717 = vmatprep.subr.mxu0 0.0
    %1718 = vmatpush1.msra.mxu0 0.0
    %1719 = vmatprep.subr.mxu0 0.0
    %1720 = vmatpush1.msra.mxu0 0.0
    %1721 = vmatprep.subr.mxu0 0.0
    %1722 = vmatpush1.msra.mxu0 0.0
    %1723 = vmatprep.subr.mxu0 0.0
    %1724 = vmatpush1.msra.mxu0 0.0
    %1725 = vmatprep.subr.mxu0 0.0
    %1726 = vmatpush1.msra.mxu0 0.0
    %1727 = vmatprep.subr.mxu0 0.0
    %1728 = vmatpush1.msra.mxu0 0.0
    %1729 = vmatprep.subr.mxu0 0.0
    %1730 = vmatpush1.msra.mxu0 0.0
    %1731 = vmatprep.subr.mxu0 0.0
    %1732 = vmatpush1.msra.mxu0 0.0
    %1733 = vmatprep.subr.mxu0 0.0
    %1734 = vmatpush1.msra.mxu0 0.0
    %1735 = vmatprep.subr.mxu0 0.0
    %1736 = vmatpush1.msra.mxu0 0.0
    %1737 = vmatprep.subr.mxu0 0.0
    %1738 = vmatpush1.msra.mxu0 0.0
    %1739 = vmatprep.subr.mxu0 0.0
    %1740 = vmatpush1.msra.mxu0 0.0
    %1741 = vmatprep.subr.mxu0 0.0
    %1742 = vmatpush1.msra.mxu0 0.0
    %1743 = vmatprep.subr.mxu0 0.0
    %1744 = vmatpush1.msra.mxu0 0.0
    %1745 = vmatprep.subr.mxu0 0.0
    %1746 = vmatpush1.msra.mxu0 0.0
    %1747 = vmatprep.subr.mxu0 0.0
    %1748 = vmatpush1.msra.mxu0 0.0
    %1749 = vmatprep.subr.mxu0 0.0
    %1750 = vmatpush1.msra.mxu0 0.0
    %1751 = vmatprep.subr.mxu0 0.0
    %1752 = vmatpush1.msra.mxu0 0.0
    %1753 = vmatprep.subr.mxu0 0.0
    %1754 = vmatpush1.msra.mxu0 0.0
    %1755 = vmatprep.subr.mxu0 0.0
    %1756 = vmatpush1.msra.mxu0 0.0
    %1757 = vmatprep.subr.mxu0 0.0
    %1758 = vmatpush1.msra.mxu0 0.0
    %1759 = vmatprep.subr.mxu0 0.0
    %1760 = vmatpush1.msra.mxu0 0.0
    %1761 = vmatprep.subr.mxu0 0.0
    %1762 = vmatpush1.msra.mxu0 0.0
    %1763 = vmatprep.subr.mxu0 0.0
    %1764 = vmatpush1.msra.mxu0 0.0
    %1765 = vmatprep.subr.mxu0 0.0
    %1766 = vmatpush1.msra.mxu0 0.0
    %1767 = vmatprep.subr.mxu0 0.0
    %1768 = vmatpush1.msra.mxu0 0.0
    %1769 = vmatprep.subr.mxu0 0.0
    %1770 = vmatpush1.msra.mxu0 0.0
    %1771 = vmatprep.subr.mxu0 0.0
    %1772 = vmatpush1.msra.mxu0 0.0
    %1773 = vmatprep.subr.mxu0 0.0
    %1774 = vmatpush1.msra.mxu0 0.0
    %1775 = vmatprep.mubr.f32.mxu0 0.0
    %1776 = vmatmul.mubr.f32.gmra.mrb[0].mxu0 %v1709
    %v1777 = vpop.f32.mrb[0].mxu0
    %v1778 = vadd.f32 0.0, %v1777
    %v1779 = vpop.f32.mrb[0].mxu0
    %1780 = vdwg.mxu0
    %v1781 = vld [vmem:[%s3 + $0x60] sm:$0xff]
    %v1782 = vld [vmem:[%s3 + $0x68] sm:$0xff]
    %v1783 = vld [vmem:[%s3 + $0x70] sm:$0xff]
    %v1784 = vld [vmem:[%s3 + $0x78] sm:$0xff]
    %v1786 = vsel %vm52, %v1702, 0
    %v1789 = vsel %vm52, %v1778, 0
    %1791 = vmatprep.subr.mxu0 0.0
    %1792 = vmatpush1.msra.mxu0 %v1781
    %1793 = vmatprep.subr.mxu0 0.0
    %1794 = vmatpush1.msra.mxu0 %v1782
    %1795 = vmatprep.subr.mxu0 0.0
    %1796 = vmatpush1.msra.mxu0 %v1783
    %1797 = vmatprep.subr.mxu0 0.0
    %1798 = vmatpush1.msra.mxu0 %v1784
    %1799 = vmatprep.subr.mxu0 0.0
    %1800 = vmatpush1.msra.mxu0 0.0
    %1801 = vmatprep.subr.mxu0 0.0
    %1802 = vmatpush1.msra.mxu0 0.0
    %1803 = vmatprep.subr.mxu0 0.0
    %1804 = vmatpush1.msra.mxu0 0.0
    %1805 = vmatprep.subr.mxu0 0.0
    %1806 = vmatpush1.msra.mxu0 0.0
    %1807 = vmatprep.subr.mxu0 0.0
    %1808 = vmatpush1.msra.mxu0 0.0
    %1809 = vmatprep.subr.mxu0 0.0
    %1810 = vmatpush1.msra.mxu0 0.0
    %1811 = vmatprep.subr.mxu0 0.0
    %1812 = vmatpush1.msra.mxu0 0.0
    %1813 = vmatprep.subr.mxu0 0.0
    %1814 = vmatpush1.msra.mxu0 0.0
    %1815 = vmatprep.subr.mxu0 0.0
    %1816 = vmatpush1.msra.mxu0 0.0
    %1817 = vmatprep.subr.mxu0 0.0
    %1818 = vmatpush1.msra.mxu0 0.0
    %1819 = vmatprep.subr.mxu0 0.0
    %1820 = vmatpush1.msra.mxu0 0.0
    %1821 = vmatprep.subr.mxu0 0.0
    %1822 = vmatpush1.msra.mxu0 0.0
    %1823 = vmatprep.subr.mxu0 0.0
    %1824 = vmatpush1.msra.mxu0 0.0
    %1825 = vmatprep.subr.mxu0 0.0
    %1826 = vmatpush1.msra.mxu0 0.0
    %1827 = vmatprep.subr.mxu0 0.0
    %1828 = vmatpush1.msra.mxu0 0.0
    %1829 = vmatprep.subr.mxu0 0.0
    %1830 = vmatpush1.msra.mxu0 0.0
    %1831 = vmatprep.subr.mxu0 0.0
    %1832 = vmatpush1.msra.mxu0 0.0
    %1833 = vmatprep.subr.mxu0 0.0
    %1834 = vmatpush1.msra.mxu0 0.0
    %1835 = vmatprep.subr.mxu0 0.0
    %1836 = vmatpush1.msra.mxu0 0.0
    %1837 = vmatprep.subr.mxu0 0.0
    %1838 = vmatpush1.msra.mxu0 0.0
    %1839 = vmatprep.subr.mxu0 0.0
    %1840 = vmatpush1.msra.mxu0 0.0
    %1841 = vmatprep.subr.mxu0 0.0
    %1842 = vmatpush1.msra.mxu0 0.0
    %1843 = vmatprep.subr.mxu0 0.0
    %1844 = vmatpush1.msra.mxu0 0.0
    %1845 = vmatprep.subr.mxu0 0.0
    %1846 = vmatpush1.msra.mxu0 0.0
    %1847 = vmatprep.subr.mxu0 0.0
    %1848 = vmatpush1.msra.mxu0 0.0
    %1849 = vmatprep.subr.mxu0 0.0
    %1850 = vmatpush1.msra.mxu0 0.0
    %1851 = vmatprep.subr.mxu0 0.0
    %1852 = vmatpush1.msra.mxu0 0.0
    %1853 = vmatprep.subr.mxu0 0.0
    %1854 = vmatpush1.msra.mxu0 0.0
    %1855 = vmatprep.mubr.f32.mxu0 0.0
    %1856 = vmatmul.mubr.f32.gmra.mrb[0].mxu0 %v1786
    %v1857 = vpop.f32.mrb[0].mxu0
    %v1858 = vadd.f32 0.0, %v1857
    %v1859 = vpop.f32.mrb[0].mxu0
    %1860 = vmatprep.mubr.f32.mxu0 0.0
    %1861 = vmatmul.mubr.f32.gmra.mrb[0].mxu0 %v1789
    %v1862 = vpop.f32.mrb[0].mxu0
    %v1863 = vadd.f32 0.0, %v1862
    %v1864 = vpop.f32.mrb[0].mxu0
    %1865 = vdwg.mxu0
    %v1866 = vadd.f32 %v1449, %v1858
    %v1867 = vadd.f32 %v1450, %v1863
    %v1868 = vld [vmem:[%s4] sm:$0x1]
    %v1870 = vlaneseq
    %v1871 = vshrl.u32 %v1870, 7
    %v1872 = vsub.s32 0, %v1871
    %v1873 = vrot.slane %v1868, %v1872
    %v1875 = vadd.f32 %v1866, %v1873
    %v1876 = vadd.f32 %v1867, %v1873
    %1877 = vst.msk [vmem:[#allocation2] sm:$0xff] %vm52, %v1875
    %1878 = vst.msk [vmem:[#allocation2 + $0x8] sm:$0xff] %vm52, %v1876
    // Predicated region
    $region22: #{tpu_custom_call.1} parent=1 // pred_check
      _
    $region23: #{tpu_custom_call.1} parent=1 // pred_check_branch
      %1880 = sbr.rel (0) target = $region25
    $region24: #{tpu_custom_call.1} parent=1 // pred_region
      %s1882 = ssub.s32 256, 256
      %1883 = vsyncadd [#allocation3], %s1882
      %s1884 = sshll.u32 [#allocation2], 4
      %s1885 = int_to_ptr.vmem [resolvable:$true] %s1884
      %1890 = dma.vmem_to_hbm [thread:$0]  %s1885, 256, %s5, [#allocation3], 128, 128, 8
    $region25: #{tpu_custom_call.1} parent=1 // pred_fallthru
      _
    // Predicated region
    $region26: #{tpu_custom_call.1} parent=1 // pred_check
      _
    $region27: #{tpu_custom_call.1} parent=1 // pred_check_branch
      %1892 = sbr.rel (0) target = $region29
    $region28: #{tpu_custom_call.1} parent=1 // pred_region
      %1893 = dma.done [#allocation3], 256
    $region29: #{tpu_custom_call.1} parent=1 // pred_fallthru
      _
    %1894 = vsyncpa [#allocation3], 1

</llo_original>
